<compile_context>
chip_gen: v5e
topology: v5e:2x2
jax: 0.10.0
libtpu: 0.0.40
codegen_flags: <defaults>
</compile_context>

<pallas_src>
import functools
import math

import jax
import jax.numpy as jnp
from jax.experimental import pallas as pl
from jax.experimental.pallas import tpu as pltpu

POSE_DIM = 34
H_DIM = 16
LANES = 128  # packed output width / fused-RHS width (one vreg lane width)


# ----------------------------------------------------------------------------
# Wrapper-side gate-column packing helpers.
#
# PyTorch LSTM gate order along the 4H axis is (i, f, g, o).
# Encoder layout (64 wide):  [i, f, o, g]           -> sigmoid 0:48, tanh 48:64
# Fused decoder layout (128 wide):
#   [i_cr, i_dec, f_cr, f_dec, o_cr, o_dec, g_cr, g_dec]
#   -> sigmoid 0:96, tanh 96:128, and i/f/o/g "all" slices are contiguous (B,32)
#      blocks that line up with c_all = [c_cr | c_dec], h_all = [h_cr | h_dec].
# ----------------------------------------------------------------------------
def _ifog_to_ifo_g(x):
    H = H_DIM
    return jnp.concatenate(
        [x[..., 0:H], x[..., H:2 * H], x[..., 3 * H:4 * H], x[..., 2 * H:3 * H]],
        axis=-1)


def _place(x4h, slot):
    """Scatter a (..., 4H) gate matrix (PyTorch i,f,g,o order) into the fused
    128-wide decoder layout.  slot 0 = crossing cell, slot 1 = pose cell."""
    H = H_DIM
    i = x4h[..., 0:H]
    f = x4h[..., H:2 * H]
    g = x4h[..., 2 * H:3 * H]
    o = x4h[..., 3 * H:4 * H]
    z = jnp.zeros_like(i)
    blocks = [i, z, f, z, o, z, g, z] if slot == 0 else [z, i, z, f, z, o, z, g]
    return jnp.concatenate(blocks, axis=-1)


# ----------------------------------------------------------------------------
# Single fused kernel: encoder LSTM over obs_s, then autoregressive decoder
# (crossing LSTM + pose LSTM + heads).  No grid; everything VMEM resident and
# all recurrent state carried in vregs (fully unrolled static loops).
# ----------------------------------------------------------------------------
def fused_seq2seq_kernel(obs_ref, enc_wih_ref, enc_whh_ref, enc_b_ref,
                         mlp_ext_ref, mlp_b_ext_ref,
                         w_in0_ref, w_rec0_ref, b0_ref,
                         w_rec_ref, delta_ref, b_rec_ref,
                         head_rhs_ref, head_b_ref,
                         out_ref,
                         *, S, B, D, H, pred_len):
    f32 = jnp.float32

    # ---------------- encoder ----------------
    # Hoisted input projection: ONE (S*B, D) @ (D, 4H) matmul, bias folded in.
    gx = jnp.dot(obs_ref[...], enc_wih_ref[...],
                 preferred_element_type=f32) + enc_b_ref[...]          # (S*B, 4H)
    enc_whh = enc_whh_ref[...]

    h = jnp.zeros((B, H), f32)
    c = jnp.zeros((B, H), f32)
    for t in range(S):  # fully unrolled; state stays in vregs
        gates = gx[t * B:(t + 1) * B, :] + jnp.dot(h, enc_whh,
                                                   preferred_element_type=f32)
        sig = jax.nn.sigmoid(gates[:, 0:3 * H])        # [i | f | o] in one launch
        g = jnp.tanh(gates[:, 3 * H:4 * H])
        c = sig[:, H:2 * H] * c + sig[:, 0:H] * g
        h = sig[:, 2 * H:3 * H] * jnp.tanh(c)

    # ---------------- decoder init ----------------
    obs_last = obs_ref[(S - 1) * B:S * B, :]                           # obs_s[-1]
    # h_all = [h_crossing | h_pose] built in one matmul ([mlp_w.T | I] RHS).
    h_all = jnp.dot(h, mlp_ext_ref[...], preferred_element_type=f32) + mlp_b_ext_ref[...]
    c_all = jnp.concatenate([jnp.zeros((B, H), f32), c], axis=-1)      # [0 | c_enc]

    w_rec = w_rec_ref[...]
    delta = delta_ref[...]
    b_rec = b_rec_ref[...]
    head_rhs = head_rhs_ref[...]
    head_b = head_b_ref[...]
    pad = jnp.zeros((B, LANES - D - 2), f32)   # hoisted (no per-iter broadcast)

    G2 = 2 * H          # 32: width of the fused [crossing | pose] state
    p_cr = None         # crossing probability, carried across steps

    # ---------------- autoregressive decoder (fully unrolled) ----------------
    for t in range(pred_len):
        if t == 0:
            # Step 0 uses obs_s[-1] as input to BOTH cells (un-folded weights).
            gates = (jnp.dot(obs_last, w_in0_ref[...], preferred_element_type=f32)
                     + jnp.dot(h_all, w_rec0_ref[...], preferred_element_type=f32)
                     + b0_ref[...])
        else:
            # Folded recurrence: embedding + pose head absorbed into RHS/bias;
            # crossing input contribution is just p * delta (VPU broadcast).
            gates = (jnp.dot(h_all, w_rec, preferred_element_type=f32)
                     + p_cr * delta + b_rec)                            # (B, 128)

        sig = jax.nn.sigmoid(gates[:, 0:3 * G2])       # all 6 sigmoid gates at once
        g = jnp.tanh(gates[:, 3 * G2:4 * G2])          # both tanh gates at once
        c_all = sig[:, G2:2 * G2] * c_all + sig[:, 0:G2] * g
        h_all = sig[:, 2 * G2:3 * G2] * jnp.tanh(c_all)

        # Fused head: cols [0, D) pose output, col D crossing logit-diff.
        head = jnp.dot(h_all, head_rhs, preferred_element_type=f32) + head_b
        curr_s = head[:, 0:D]
        p_cr = jax.nn.sigmoid(head[:, D:D + 1])        # softmax([l0,l1])[0]
        q_cr = 1.0 - p_cr

        # Lane-dense packed output row: [pose (D) | p | 1-p | zero pad].
        out_ref[t] = jnp.concatenate([curr_s, p_cr, q_cr, pad], axis=-1)


# ----------------------------------------------------------------------------
# Wrapper: weight folding / packing + one pallas_call.
# ----------------------------------------------------------------------------
def lstm_forward(obs_s, p, pred_len):
    S, B, D = obs_s.shape
    H = H_DIM
    f32 = jnp.float32
    HI = jax.lax.Precision.HIGHEST

    # Pad batch to the f32 sublane minimum (8) -> full vregs, aligned slices,
    # unmasked (8,128) output stores.
    B_pad = max(8, ((B + 7) // 8) * 8)
    obs_pad = jnp.zeros((S, B_pad, D), f32).at[:, :B, :].set(obs_s.astype(f32))

    # encoder weights (pre-transposed, biases fused, gate columns [i,f,o,g])
    enc_wih_r = _ifog_to_ifo_g(p['enc_wih'].T)                          # (D, 4H)
    enc_whh_r = _ifog_to_ifo_g(p['enc_whh'].T)                          # (H, 4H)
    enc_b_r = _ifog_to_ifo_g((p['enc_bih'] + p['enc_bhh']).reshape(1, 4 * H))

    # h_all0 = [mlp(h_enc) | h_enc] in one matmul.
    mlp_ext = jnp.concatenate([p['mlp_w'].T, jnp.eye(H, dtype=f32)], axis=1)   # (H, 2H)
    mlp_b_ext = jnp.concatenate([p['mlp_b'], jnp.zeros((H,), f32)]).reshape(1, 2 * H)

    cr_b = p['cr_bih'] + p['cr_bhh']
    dec_b = p['dec_bih'] + p['dec_bhh']

    # ---- decoder step 0 (un-folded: both cells consume obs_s[-1]) ----
    w_in0 = _place(p['cr_wih'].T, 0) + _place(p['dec_wih'].T, 1)        # (D, 128)
    w_rec0 = jnp.concatenate([_place(p['cr_whh'].T, 0),
                              _place(p['dec_whh'].T, 1)], axis=0)       # (2H, 128)
    b0 = _place(cr_b.reshape(1, -1), 0) + _place(dec_b.reshape(1, -1), 1)

    # ---- folded recurrence for steps >= 1 ----
    # crossing: last_cr = [p,1-p] @ emb_w.T + emb_b
    #   -> curr_cr @ (emb_w.T @ cr_wih.T) = M[1] + p*(M[0]-M[1])
    M = jnp.dot(p['emb_w'].T, p['cr_wih'].T, precision=HI)              # (2, 4H)
    # pose: last_s = h_dec @ fc_w.T + fc_b  -> fold into hidden matrix / bias
    whh_pose_f = p['dec_whh'].T + jnp.dot(p['fc_w'].T, p['dec_wih'].T, precision=HI)
    w_rec = jnp.concatenate([_place(p['cr_whh'].T, 0),
                             _place(whh_pose_f, 1)], axis=0)            # (2H, 128)
    delta = _place((M[0] - M[1]).reshape(1, -1), 0)                     # (1, 128)
    b_cr_f = cr_b + jnp.dot(p['emb_b'], p['cr_wih'].T, precision=HI) + M[1]
    b_dec_f = dec_b + jnp.dot(p['fc_b'], p['dec_wih'].T, precision=HI)
    b_rec = _place(b_cr_f.reshape(1, -1), 0) + _place(b_dec_f.reshape(1, -1), 1)

    # fused heads: pose (cols 0:D) + crossing logit-diff (col D); lane-padded to 128
    head_rhs = jnp.zeros((2 * H, LANES), f32)
    head_rhs = head_rhs.at[0:H, D].set(p['fcc_w'][0] - p['fcc_w'][1])   # h_cr -> l0-l1
    head_rhs = head_rhs.at[H:2 * H, 0:D].set(p['fc_w'].T)               # h_dec -> pose
    head_b = jnp.zeros((1, LANES), f32)
    head_b = head_b.at[0, 0:D].set(p['fc_b'])
    head_b = head_b.at[0, D].set(p['fcc_b'][0] - p['fcc_b'][1])

    inputs = (obs_pad.reshape(S * B_pad, D), enc_wih_r, enc_whh_r, enc_b_r,
              mlp_ext, mlp_b_ext, w_in0, w_rec0, b0, w_rec, delta, b_rec,
              head_rhs, head_b)

    kernel = functools.partial(fused_seq2seq_kernel,
                               S=S, B=B_pad, D=D, H=H, pred_len=pred_len)
    vmem_spec = pl.BlockSpec(memory_space=pltpu.MemorySpace.VMEM)

    slab = pl.pallas_call(
        kernel,
        out_shape=jax.ShapeDtypeStruct((pred_len, B_pad, LANES), f32),
        in_specs=[vmem_spec] * len(inputs),
        out_specs=vmem_spec,
    )(*inputs)

    pred_s = slab[:, :B, 0:D]
    pred_crossing = slab[:, :B, D:D + 2]
    return pred_s, pred_crossing


# ----------------------------------------------------------------------------
# Deterministic parameter init (PyTorch-shaped weights).
# ----------------------------------------------------------------------------
def init_params(key):
    H, D = H_DIM, POSE_DIM
    spec = [
        ('enc_wih', (4 * H, D)), ('enc_whh', (4 * H, H)), ('enc_bih', (4 * H,)), ('enc_bhh', (4 * H,)),
        ('dec_wih', (4 * H, D)), ('dec_whh', (4 * H, H)), ('dec_bih', (4 * H,)), ('dec_bhh', (4 * H,)),
        ('cr_wih', (4 * H, D)), ('cr_whh', (4 * H, H)), ('cr_bih', (4 * H,)), ('cr_bhh', (4 * H,)),
        ('fc_w', (D, H)), ('fc_b', (D,)),
        ('fcc_w', (2, H)), ('fcc_b', (2,)),
        ('mlp_w', (H, H)), ('mlp_b', (H,)),
        ('emb_w', (D, 2)), ('emb_b', (D,)),
    ]
    keys = jax.random.split(key, len(spec))
    params = {}
    for (name, shape), k in zip(spec, keys):
        fan = shape[-1] if len(shape) > 1 else H
        bound = 1.0 / math.sqrt(fan)
        params[name] = jax.random.uniform(k, shape, jnp.float32, -bound, bound)
    return params


# ----------------------------------------------------------------------------
# Plain-JAX reference (mirrors the PyTorch forward) for a correctness check.
# ----------------------------------------------------------------------------
def reference_forward(obs_s, p, pred_len):
    S, B, D = obs_s.shape
    H = H_DIM

    def cell(x, h, c, wih, whh, bih, bhh):
        gates = x @ wih.T + bih + h @ whh.T + bhh
        i_g, f_g, g_g, o_g = jnp.split(gates, 4, axis=-1)
        c = jax.nn.sigmoid(f_g) * c + jax.nn.sigmoid(i_g) * jnp.tanh(g_g)
        h = jax.nn.sigmoid(o_g) * jnp.tanh(c)
        return h, c

    h = jnp.zeros((B, H), jnp.float32)
    c = jnp.zeros((B, H), jnp.float32)
    for t in range(S):
        h, c = cell(obs_s[t], h, c, p['enc_wih'], p['enc_whh'], p['enc_bih'], p['enc_bhh'])

    last_s = obs_s[-1]
    last_cr = obs_s[-1]
    h_cr = h @ p['mlp_w'].T + p['mlp_b']
    c_cr = jnp.zeros((B, H), jnp.float32)
    h_dec, c_dec = h, c
    pred_s, pred_cr = [], []
    for _ in range(pred_len):
        h_cr, c_cr = cell(last_cr, h_cr, c_cr, p['cr_wih'], p['cr_whh'], p['cr_bih'], p['cr_bhh'])
        curr_cr = jax.nn.softmax(h_cr @ p['fcc_w'].T + p['fcc_b'], axis=-1)
        pred_cr.append(curr_cr)
        last_cr = curr_cr @ p['emb_w'].T + p['emb_b']

        h_dec, c_dec = cell(last_s, h_dec, c_dec, p['dec_wih'], p['dec_whh'], p['dec_bih'], p['dec_bhh'])
        curr_s = h_dec @ p['fc_w'].T + p['fc_b']
        pred_s.append(curr_s)
        last_s = curr_s
    return jnp.stack(pred_s), jnp.stack(pred_cr)


if __name__ == "__main__":
    seq_len, batch, pred_len = 8, 2, 6
    key = jax.random.PRNGKey(0)
    k_obs, k_par = jax.random.split(key)
    obs_s = jax.random.normal(k_obs, (seq_len, batch, POSE_DIM), jnp.float32)
    params = init_params(k_par)

    fwd = jax.jit(lstm_forward, static_argnums=(2,))
    pred_s, pred_crossing = fwd(obs_s, params, pred_len)
    jax.block_until_ready((pred_s, pred_crossing))

    with jax.default_matmul_precision("float32"):
        ref_s, ref_cr = reference_forward(obs_s, params, pred_len)

    assert pred_s.shape == (pred_len, batch, POSE_DIM)
    assert pred_crossing.shape == (pred_len, batch, 2)
    assert jnp.allclose(pred_s, ref_s, atol=1e-2, rtol=1e-2)
    assert jnp.allclose(pred_crossing, ref_cr, atol=1e-2, rtol=1e-2)

    print("KERNEL_OK")
</pallas_src>

<mosaic_0001>
module attributes {stable_mosaic.version = 11 : i64} {
  func.func @fused_seq2seq_kernel(%arg0: memref<64x34xf32, #tpu.memory_space<vmem>>, %arg1: memref<34x64xf32, #tpu.memory_space<vmem>>, %arg2: memref<16x64xf32, #tpu.memory_space<vmem>>, %arg3: memref<1x64xf32, #tpu.memory_space<vmem>>, %arg4: memref<16x32xf32, #tpu.memory_space<vmem>>, %arg5: memref<1x32xf32, #tpu.memory_space<vmem>>, %arg6: memref<34x128xf32, #tpu.memory_space<vmem>>, %arg7: memref<32x128xf32, #tpu.memory_space<vmem>>, %arg8: memref<1x128xf32, #tpu.memory_space<vmem>>, %arg9: memref<32x128xf32, #tpu.memory_space<vmem>>, %arg10: memref<1x128xf32, #tpu.memory_space<vmem>>, %arg11: memref<1x128xf32, #tpu.memory_space<vmem>>, %arg12: memref<32x128xf32, #tpu.memory_space<vmem>>, %arg13: memref<1x128xf32, #tpu.memory_space<vmem>>, %arg14: memref<6x8x128xf32, #tpu.memory_space<vmem>>) attributes {dimension_semantics = [], scalar_prefetch = 0 : i64, scratch_operands = 0 : i64, tpu.core_type = #tpu.core_type<tc>} {
    %c0 = arith.constant 0 : index
    %c0_0 = arith.constant 0 : index
    %0 = vector.load %arg0[%c0, %c0_0] : memref<64x34xf32, #tpu.memory_space<vmem>>, vector<64x34xf32>
    %c0_1 = arith.constant 0 : index
    %c0_2 = arith.constant 0 : index
    %1 = vector.load %arg1[%c0_1, %c0_2] : memref<34x64xf32, #tpu.memory_space<vmem>>, vector<34x64xf32>
    %cst = arith.constant dense<0.000000e+00> : vector<64x64xf32>
    %2 = tpu.matmul %0, %1, %cst {dimension_numbers = #tpu.dot_dimension_numbers<[1], [0], [0], [1], [0, 0, 1, 1], [], []>} : vector<64x34xf32>, vector<34x64xf32>, vector<64x64xf32> -> vector<64x64xf32>
    %c0_3 = arith.constant 0 : index
    %c0_4 = arith.constant 0 : index
    %3 = vector.load %arg3[%c0_3, %c0_4] : memref<1x64xf32, #tpu.memory_space<vmem>>, vector<1x64xf32>
    %4 = vector.broadcast %3 : vector<1x64xf32> to vector<64x64xf32>
    %5 = arith.addf %2, %4 : vector<64x64xf32>
    %c0_5 = arith.constant 0 : index
    %c0_6 = arith.constant 0 : index
    %6 = vector.load %arg2[%c0_5, %c0_6] : memref<16x64xf32, #tpu.memory_space<vmem>>, vector<16x64xf32>
    %cst_7 = arith.constant 0.000000e+00 : f32
    %7 = vector.broadcast %cst_7 : f32 to vector<8x16xf32>
    %cst_8 = arith.constant 0.000000e+00 : f32
    %8 = vector.broadcast %cst_8 : f32 to vector<8x16xf32>
    %9 = vector.extract_strided_slice %5 {offsets = [0, 0], sizes = [8, 64], strides = [1, 1]} : vector<64x64xf32> to vector<8x64xf32>
    %cst_9 = arith.constant dense<0.000000e+00> : vector<8x64xf32>
    %10 = tpu.matmul %7, %6, %cst_9 {dimension_numbers = #tpu.dot_dimension_numbers<[1], [0], [0], [1], [0, 0, 1, 1], [], []>} : vector<8x16xf32>, vector<16x64xf32>, vector<8x64xf32> -> vector<8x64xf32>
    %11 = arith.addf %9, %10 : vector<8x64xf32>
    %12 = vector.extract_strided_slice %11 {offsets = [0, 0], sizes = [8, 48], strides = [1, 1]} : vector<8x64xf32> to vector<8x48xf32>
    %13 = arith.negf %12 : vector<8x48xf32>
    %14 = math.exp %13 : vector<8x48xf32>
    %cst_10 = arith.constant 1.000000e+00 : f32
    %15 = vector.broadcast %cst_10 : f32 to vector<8x48xf32>
    %16 = arith.addf %15, %14 : vector<8x48xf32>
    %17 = arith.divf %15, %16 : vector<8x48xf32>
    %18 = vector.extract_strided_slice %11 {offsets = [0, 48], sizes = [8, 16], strides = [1, 1]} : vector<8x64xf32> to vector<8x16xf32>
    %19 = math.tanh %18 : vector<8x16xf32>
    %20 = vector.extract_strided_slice %17 {offsets = [0, 16], sizes = [8, 16], strides = [1, 1]} : vector<8x48xf32> to vector<8x16xf32>
    %21 = arith.mulf %20, %8 : vector<8x16xf32>
    %22 = vector.extract_strided_slice %17 {offsets = [0, 0], sizes = [8, 16], strides = [1, 1]} : vector<8x48xf32> to vector<8x16xf32>
    %23 = arith.mulf %22, %19 : vector<8x16xf32>
    %24 = arith.addf %21, %23 : vector<8x16xf32>
    %25 = vector.extract_strided_slice %17 {offsets = [0, 32], sizes = [8, 16], strides = [1, 1]} : vector<8x48xf32> to vector<8x16xf32>
    %26 = math.tanh %24 : vector<8x16xf32>
    %27 = arith.mulf %25, %26 : vector<8x16xf32>
    %28 = vector.extract_strided_slice %5 {offsets = [8, 0], sizes = [8, 64], strides = [1, 1]} : vector<64x64xf32> to vector<8x64xf32>
    %cst_11 = arith.constant dense<0.000000e+00> : vector<8x64xf32>
    %29 = tpu.matmul %27, %6, %cst_11 {dimension_numbers = #tpu.dot_dimension_numbers<[1], [0], [0], [1], [0, 0, 1, 1], [], []>} : vector<8x16xf32>, vector<16x64xf32>, vector<8x64xf32> -> vector<8x64xf32>
    %30 = arith.addf %28, %29 : vector<8x64xf32>
    %31 = vector.extract_strided_slice %30 {offsets = [0, 0], sizes = [8, 48], strides = [1, 1]} : vector<8x64xf32> to vector<8x48xf32>
    %32 = arith.negf %31 : vector<8x48xf32>
    %33 = math.exp %32 : vector<8x48xf32>
    %cst_12 = arith.constant 1.000000e+00 : f32
    %34 = vector.broadcast %cst_12 : f32 to vector<8x48xf32>
    %35 = arith.addf %34, %33 : vector<8x48xf32>
    %36 = arith.divf %34, %35 : vector<8x48xf32>
    %37 = vector.extract_strided_slice %30 {offsets = [0, 48], sizes = [8, 16], strides = [1, 1]} : vector<8x64xf32> to vector<8x16xf32>
    %38 = math.tanh %37 : vector<8x16xf32>
    %39 = vector.extract_strided_slice %36 {offsets = [0, 16], sizes = [8, 16], strides = [1, 1]} : vector<8x48xf32> to vector<8x16xf32>
    %40 = arith.mulf %39, %24 : vector<8x16xf32>
    %41 = vector.extract_strided_slice %36 {offsets = [0, 0], sizes = [8, 16], strides = [1, 1]} : vector<8x48xf32> to vector<8x16xf32>
    %42 = arith.mulf %41, %38 : vector<8x16xf32>
    %43 = arith.addf %40, %42 : vector<8x16xf32>
    %44 = vector.extract_strided_slice %36 {offsets = [0, 32], sizes = [8, 16], strides = [1, 1]} : vector<8x48xf32> to vector<8x16xf32>
    %45 = math.tanh %43 : vector<8x16xf32>
    %46 = arith.mulf %44, %45 : vector<8x16xf32>
    %47 = vector.extract_strided_slice %5 {offsets = [16, 0], sizes = [8, 64], strides = [1, 1]} : vector<64x64xf32> to vector<8x64xf32>
    %cst_13 = arith.constant dense<0.000000e+00> : vector<8x64xf32>
    %48 = tpu.matmul %46, %6, %cst_13 {dimension_numbers = #tpu.dot_dimension_numbers<[1], [0], [0], [1], [0, 0, 1, 1], [], []>} : vector<8x16xf32>, vector<16x64xf32>, vector<8x64xf32> -> vector<8x64xf32>
    %49 = arith.addf %47, %48 : vector<8x64xf32>
    %50 = vector.extract_strided_slice %49 {offsets = [0, 0], sizes = [8, 48], strides = [1, 1]} : vector<8x64xf32> to vector<8x48xf32>
    %51 = arith.negf %50 : vector<8x48xf32>
    %52 = math.exp %51 : vector<8x48xf32>
    %cst_14 = arith.constant 1.000000e+00 : f32
    %53 = vector.broadcast %cst_14 : f32 to vector<8x48xf32>
    %54 = arith.addf %53, %52 : vector<8x48xf32>
    %55 = arith.divf %53, %54 : vector<8x48xf32>
    %56 = vector.extract_strided_slice %49 {offsets = [0, 48], sizes = [8, 16], strides = [1, 1]} : vector<8x64xf32> to vector<8x16xf32>
    %57 = math.tanh %56 : vector<8x16xf32>
    %58 = vector.extract_strided_slice %55 {offsets = [0, 16], sizes = [8, 16], strides = [1, 1]} : vector<8x48xf32> to vector<8x16xf32>
    %59 = arith.mulf %58, %43 : vector<8x16xf32>
    %60 = vector.extract_strided_slice %55 {offsets = [0, 0], sizes = [8, 16], strides = [1, 1]} : vector<8x48xf32> to vector<8x16xf32>
    %61 = arith.mulf %60, %57 : vector<8x16xf32>
    %62 = arith.addf %59, %61 : vector<8x16xf32>
    %63 = vector.extract_strided_slice %55 {offsets = [0, 32], sizes = [8, 16], strides = [1, 1]} : vector<8x48xf32> to vector<8x16xf32>
    %64 = math.tanh %62 : vector<8x16xf32>
    %65 = arith.mulf %63, %64 : vector<8x16xf32>
    %66 = vector.extract_strided_slice %5 {offsets = [24, 0], sizes = [8, 64], strides = [1, 1]} : vector<64x64xf32> to vector<8x64xf32>
    %cst_15 = arith.constant dense<0.000000e+00> : vector<8x64xf32>
    %67 = tpu.matmul %65, %6, %cst_15 {dimension_numbers = #tpu.dot_dimension_numbers<[1], [0], [0], [1], [0, 0, 1, 1], [], []>} : vector<8x16xf32>, vector<16x64xf32>, vector<8x64xf32> -> vector<8x64xf32>
    %68 = arith.addf %66, %67 : vector<8x64xf32>
    %69 = vector.extract_strided_slice %68 {offsets = [0, 0], sizes = [8, 48], strides = [1, 1]} : vector<8x64xf32> to vector<8x48xf32>
    %70 = arith.negf %69 : vector<8x48xf32>
    %71 = math.exp %70 : vector<8x48xf32>
    %cst_16 = arith.constant 1.000000e+00 : f32
    %72 = vector.broadcast %cst_16 : f32 to vector<8x48xf32>
    %73 = arith.addf %72, %71 : vector<8x48xf32>
    %74 = arith.divf %72, %73 : vector<8x48xf32>
    %75 = vector.extract_strided_slice %68 {offsets = [0, 48], sizes = [8, 16], strides = [1, 1]} : vector<8x64xf32> to vector<8x16xf32>
    %76 = math.tanh %75 : vector<8x16xf32>
    %77 = vector.extract_strided_slice %74 {offsets = [0, 16], sizes = [8, 16], strides = [1, 1]} : vector<8x48xf32> to vector<8x16xf32>
    %78 = arith.mulf %77, %62 : vector<8x16xf32>
    %79 = vector.extract_strided_slice %74 {offsets = [0, 0], sizes = [8, 16], strides = [1, 1]} : vector<8x48xf32> to vector<8x16xf32>
    %80 = arith.mulf %79, %76 : vector<8x16xf32>
    %81 = arith.addf %78, %80 : vector<8x16xf32>
    %82 = vector.extract_strided_slice %74 {offsets = [0, 32], sizes = [8, 16], strides = [1, 1]} : vector<8x48xf32> to vector<8x16xf32>
    %83 = math.tanh %81 : vector<8x16xf32>
    %84 = arith.mulf %82, %83 : vector<8x16xf32>
    %85 = vector.extract_strided_slice %5 {offsets = [32, 0], sizes = [8, 64], strides = [1, 1]} : vector<64x64xf32> to vector<8x64xf32>
    %cst_17 = arith.constant dense<0.000000e+00> : vector<8x64xf32>
    %86 = tpu.matmul %84, %6, %cst_17 {dimension_numbers = #tpu.dot_dimension_numbers<[1], [0], [0], [1], [0, 0, 1, 1], [], []>} : vector<8x16xf32>, vector<16x64xf32>, vector<8x64xf32> -> vector<8x64xf32>
    %87 = arith.addf %85, %86 : vector<8x64xf32>
    %88 = vector.extract_strided_slice %87 {offsets = [0, 0], sizes = [8, 48], strides = [1, 1]} : vector<8x64xf32> to vector<8x48xf32>
    %89 = arith.negf %88 : vector<8x48xf32>
    %90 = math.exp %89 : vector<8x48xf32>
    %cst_18 = arith.constant 1.000000e+00 : f32
    %91 = vector.broadcast %cst_18 : f32 to vector<8x48xf32>
    %92 = arith.addf %91, %90 : vector<8x48xf32>
    %93 = arith.divf %91, %92 : vector<8x48xf32>
    %94 = vector.extract_strided_slice %87 {offsets = [0, 48], sizes = [8, 16], strides = [1, 1]} : vector<8x64xf32> to vector<8x16xf32>
    %95 = math.tanh %94 : vector<8x16xf32>
    %96 = vector.extract_strided_slice %93 {offsets = [0, 16], sizes = [8, 16], strides = [1, 1]} : vector<8x48xf32> to vector<8x16xf32>
    %97 = arith.mulf %96, %81 : vector<8x16xf32>
    %98 = vector.extract_strided_slice %93 {offsets = [0, 0], sizes = [8, 16], strides = [1, 1]} : vector<8x48xf32> to vector<8x16xf32>
    %99 = arith.mulf %98, %95 : vector<8x16xf32>
    %100 = arith.addf %97, %99 : vector<8x16xf32>
    %101 = vector.extract_strided_slice %93 {offsets = [0, 32], sizes = [8, 16], strides = [1, 1]} : vector<8x48xf32> to vector<8x16xf32>
    %102 = math.tanh %100 : vector<8x16xf32>
    %103 = arith.mulf %101, %102 : vector<8x16xf32>
    %104 = vector.extract_strided_slice %5 {offsets = [40, 0], sizes = [8, 64], strides = [1, 1]} : vector<64x64xf32> to vector<8x64xf32>
    %cst_19 = arith.constant dense<0.000000e+00> : vector<8x64xf32>
    %105 = tpu.matmul %103, %6, %cst_19 {dimension_numbers = #tpu.dot_dimension_numbers<[1], [0], [0], [1], [0, 0, 1, 1], [], []>} : vector<8x16xf32>, vector<16x64xf32>, vector<8x64xf32> -> vector<8x64xf32>
    %106 = arith.addf %104, %105 : vector<8x64xf32>
    %107 = vector.extract_strided_slice %106 {offsets = [0, 0], sizes = [8, 48], strides = [1, 1]} : vector<8x64xf32> to vector<8x48xf32>
    %108 = arith.negf %107 : vector<8x48xf32>
    %109 = math.exp %108 : vector<8x48xf32>
    %cst_20 = arith.constant 1.000000e+00 : f32
    %110 = vector.broadcast %cst_20 : f32 to vector<8x48xf32>
    %111 = arith.addf %110, %109 : vector<8x48xf32>
    %112 = arith.divf %110, %111 : vector<8x48xf32>
    %113 = vector.extract_strided_slice %106 {offsets = [0, 48], sizes = [8, 16], strides = [1, 1]} : vector<8x64xf32> to vector<8x16xf32>
    %114 = math.tanh %113 : vector<8x16xf32>
    %115 = vector.extract_strided_slice %112 {offsets = [0, 16], sizes = [8, 16], strides = [1, 1]} : vector<8x48xf32> to vector<8x16xf32>
    %116 = arith.mulf %115, %100 : vector<8x16xf32>
    %117 = vector.extract_strided_slice %112 {offsets = [0, 0], sizes = [8, 16], strides = [1, 1]} : vector<8x48xf32> to vector<8x16xf32>
    %118 = arith.mulf %117, %114 : vector<8x16xf32>
    %119 = arith.addf %116, %118 : vector<8x16xf32>
    %120 = vector.extract_strided_slice %112 {offsets = [0, 32], sizes = [8, 16], strides = [1, 1]} : vector<8x48xf32> to vector<8x16xf32>
    %121 = math.tanh %119 : vector<8x16xf32>
    %122 = arith.mulf %120, %121 : vector<8x16xf32>
    %123 = vector.extract_strided_slice %5 {offsets = [48, 0], sizes = [8, 64], strides = [1, 1]} : vector<64x64xf32> to vector<8x64xf32>
    %cst_21 = arith.constant dense<0.000000e+00> : vector<8x64xf32>
    %124 = tpu.matmul %122, %6, %cst_21 {dimension_numbers = #tpu.dot_dimension_numbers<[1], [0], [0], [1], [0, 0, 1, 1], [], []>} : vector<8x16xf32>, vector<16x64xf32>, vector<8x64xf32> -> vector<8x64xf32>
    %125 = arith.addf %123, %124 : vector<8x64xf32>
    %126 = vector.extract_strided_slice %125 {offsets = [0, 0], sizes = [8, 48], strides = [1, 1]} : vector<8x64xf32> to vector<8x48xf32>
    %127 = arith.negf %126 : vector<8x48xf32>
    %128 = math.exp %127 : vector<8x48xf32>
    %cst_22 = arith.constant 1.000000e+00 : f32
    %129 = vector.broadcast %cst_22 : f32 to vector<8x48xf32>
    %130 = arith.addf %129, %128 : vector<8x48xf32>
    %131 = arith.divf %129, %130 : vector<8x48xf32>
    %132 = vector.extract_strided_slice %125 {offsets = [0, 48], sizes = [8, 16], strides = [1, 1]} : vector<8x64xf32> to vector<8x16xf32>
    %133 = math.tanh %132 : vector<8x16xf32>
    %134 = vector.extract_strided_slice %131 {offsets = [0, 16], sizes = [8, 16], strides = [1, 1]} : vector<8x48xf32> to vector<8x16xf32>
    %135 = arith.mulf %134, %119 : vector<8x16xf32>
    %136 = vector.extract_strided_slice %131 {offsets = [0, 0], sizes = [8, 16], strides = [1, 1]} : vector<8x48xf32> to vector<8x16xf32>
    %137 = arith.mulf %136, %133 : vector<8x16xf32>
    %138 = arith.addf %135, %137 : vector<8x16xf32>
    %139 = vector.extract_strided_slice %131 {offsets = [0, 32], sizes = [8, 16], strides = [1, 1]} : vector<8x48xf32> to vector<8x16xf32>
    %140 = math.tanh %138 : vector<8x16xf32>
    %141 = arith.mulf %139, %140 : vector<8x16xf32>
    %142 = vector.extract_strided_slice %5 {offsets = [56, 0], sizes = [8, 64], strides = [1, 1]} : vector<64x64xf32> to vector<8x64xf32>
    %cst_23 = arith.constant dense<0.000000e+00> : vector<8x64xf32>
    %143 = tpu.matmul %141, %6, %cst_23 {dimension_numbers = #tpu.dot_dimension_numbers<[1], [0], [0], [1], [0, 0, 1, 1], [], []>} : vector<8x16xf32>, vector<16x64xf32>, vector<8x64xf32> -> vector<8x64xf32>
    %144 = arith.addf %142, %143 : vector<8x64xf32>
    %145 = vector.extract_strided_slice %144 {offsets = [0, 0], sizes = [8, 48], strides = [1, 1]} : vector<8x64xf32> to vector<8x48xf32>
    %146 = arith.negf %145 : vector<8x48xf32>
    %147 = math.exp %146 : vector<8x48xf32>
    %cst_24 = arith.constant 1.000000e+00 : f32
    %148 = vector.broadcast %cst_24 : f32 to vector<8x48xf32>
    %149 = arith.addf %148, %147 : vector<8x48xf32>
    %150 = arith.divf %148, %149 : vector<8x48xf32>
    %151 = vector.extract_strided_slice %144 {offsets = [0, 48], sizes = [8, 16], strides = [1, 1]} : vector<8x64xf32> to vector<8x16xf32>
    %152 = math.tanh %151 : vector<8x16xf32>
    %153 = vector.extract_strided_slice %150 {offsets = [0, 16], sizes = [8, 16], strides = [1, 1]} : vector<8x48xf32> to vector<8x16xf32>
    %154 = arith.mulf %153, %138 : vector<8x16xf32>
    %155 = vector.extract_strided_slice %150 {offsets = [0, 0], sizes = [8, 16], strides = [1, 1]} : vector<8x48xf32> to vector<8x16xf32>
    %156 = arith.mulf %155, %152 : vector<8x16xf32>
    %157 = arith.addf %154, %156 : vector<8x16xf32>
    %158 = vector.extract_strided_slice %150 {offsets = [0, 32], sizes = [8, 16], strides = [1, 1]} : vector<8x48xf32> to vector<8x16xf32>
    %159 = math.tanh %157 : vector<8x16xf32>
    %160 = arith.mulf %158, %159 : vector<8x16xf32>
    %c56 = arith.constant 56 : index
    %c0_25 = arith.constant 0 : index
    %161 = vector.load %arg0[%c56, %c0_25] : memref<64x34xf32, #tpu.memory_space<vmem>>, vector<8x34xf32>
    %c0_26 = arith.constant 0 : index
    %c0_27 = arith.constant 0 : index
    %162 = vector.load %arg4[%c0_26, %c0_27] : memref<16x32xf32, #tpu.memory_space<vmem>>, vector<16x32xf32>
    %cst_28 = arith.constant dense<0.000000e+00> : vector<8x32xf32>
    %163 = tpu.matmul %160, %162, %cst_28 {dimension_numbers = #tpu.dot_dimension_numbers<[1], [0], [0], [1], [0, 0, 1, 1], [], []>} : vector<8x16xf32>, vector<16x32xf32>, vector<8x32xf32> -> vector<8x32xf32>
    %c0_29 = arith.constant 0 : index
    %c0_30 = arith.constant 0 : index
    %164 = vector.load %arg5[%c0_29, %c0_30] : memref<1x32xf32, #tpu.memory_space<vmem>>, vector<1x32xf32>
    %165 = vector.broadcast %164 : vector<1x32xf32> to vector<8x32xf32>
    %166 = arith.addf %163, %165 : vector<8x32xf32>
    %cst_31 = arith.constant 0.000000e+00 : f32
    %167 = vector.broadcast %cst_31 : f32 to vector<8x16xf32>
    %168 = tpu.concatenate %167, %157 in 1 : vector<8x16xf32>, vector<8x16xf32> -> vector<8x32xf32>
    %c0_32 = arith.constant 0 : index
    %c0_33 = arith.constant 0 : index
    %169 = vector.load %arg9[%c0_32, %c0_33] : memref<32x128xf32, #tpu.memory_space<vmem>>, vector<32x128xf32>
    %c0_34 = arith.constant 0 : index
    %c0_35 = arith.constant 0 : index
    %170 = vector.load %arg10[%c0_34, %c0_35] : memref<1x128xf32, #tpu.memory_space<vmem>>, vector<1x128xf32>
    %c0_36 = arith.constant 0 : index
    %c0_37 = arith.constant 0 : index
    %171 = vector.load %arg11[%c0_36, %c0_37] : memref<1x128xf32, #tpu.memory_space<vmem>>, vector<1x128xf32>
    %c0_38 = arith.constant 0 : index
    %c0_39 = arith.constant 0 : index
    %172 = vector.load %arg12[%c0_38, %c0_39] : memref<32x128xf32, #tpu.memory_space<vmem>>, vector<32x128xf32>
    %c0_40 = arith.constant 0 : index
    %c0_41 = arith.constant 0 : index
    %173 = vector.load %arg13[%c0_40, %c0_41] : memref<1x128xf32, #tpu.memory_space<vmem>>, vector<1x128xf32>
    %cst_42 = arith.constant 0.000000e+00 : f32
    %174 = vector.broadcast %cst_42 : f32 to vector<8x92xf32>
    %c0_43 = arith.constant 0 : index
    %c0_44 = arith.constant 0 : index
    %175 = vector.load %arg6[%c0_43, %c0_44] : memref<34x128xf32, #tpu.memory_space<vmem>>, vector<34x128xf32>
    %cst_45 = arith.constant dense<0.000000e+00> : vector<8x128xf32>
    %176 = tpu.matmul %161, %175, %cst_45 {dimension_numbers = #tpu.dot_dimension_numbers<[1], [0], [0], [1], [0, 0, 1, 1], [], []>} : vector<8x34xf32>, vector<34x128xf32>, vector<8x128xf32> -> vector<8x128xf32>
    %c0_46 = arith.constant 0 : index
    %c0_47 = arith.constant 0 : index
    %177 = vector.load %arg7[%c0_46, %c0_47] : memref<32x128xf32, #tpu.memory_space<vmem>>, vector<32x128xf32>
    %cst_48 = arith.constant dense<0.000000e+00> : vector<8x128xf32>
    %178 = tpu.matmul %166, %177, %cst_48 {dimension_numbers = #tpu.dot_dimension_numbers<[1], [0], [0], [1], [0, 0, 1, 1], [], []>} : vector<8x32xf32>, vector<32x128xf32>, vector<8x128xf32> -> vector<8x128xf32>
    %179 = arith.addf %176, %178 : vector<8x128xf32>
    %c0_49 = arith.constant 0 : index
    %c0_50 = arith.constant 0 : index
    %180 = vector.load %arg8[%c0_49, %c0_50] : memref<1x128xf32, #tpu.memory_space<vmem>>, vector<1x128xf32>
    %181 = vector.broadcast %180 : vector<1x128xf32> to vector<8x128xf32>
    %182 = arith.addf %179, %181 : vector<8x128xf32>
    %183 = vector.extract_strided_slice %182 {offsets = [0, 0], sizes = [8, 96], strides = [1, 1]} : vector<8x128xf32> to vector<8x96xf32>
    %184 = arith.negf %183 : vector<8x96xf32>
    %185 = math.exp %184 : vector<8x96xf32>
    %cst_51 = arith.constant 1.000000e+00 : f32
    %186 = vector.broadcast %cst_51 : f32 to vector<8x96xf32>
    %187 = arith.addf %186, %185 : vector<8x96xf32>
    %188 = arith.divf %186, %187 : vector<8x96xf32>
    %189 = vector.extract_strided_slice %182 {offsets = [0, 96], sizes = [8, 32], strides = [1, 1]} : vector<8x128xf32> to vector<8x32xf32>
    %190 = math.tanh %189 : vector<8x32xf32>
    %191 = vector.extract_strided_slice %188 {offsets = [0, 32], sizes = [8, 32], strides = [1, 1]} : vector<8x96xf32> to vector<8x32xf32>
    %192 = arith.mulf %191, %168 : vector<8x32xf32>
    %193 = vector.extract_strided_slice %188 {offsets = [0, 0], sizes = [8, 32], strides = [1, 1]} : vector<8x96xf32> to vector<8x32xf32>
    %194 = arith.mulf %193, %190 : vector<8x32xf32>
    %195 = arith.addf %192, %194 : vector<8x32xf32>
    %196 = vector.extract_strided_slice %188 {offsets = [0, 64], sizes = [8, 32], strides = [1, 1]} : vector<8x96xf32> to vector<8x32xf32>
    %197 = math.tanh %195 : vector<8x32xf32>
    %198 = arith.mulf %196, %197 : vector<8x32xf32>
    %cst_52 = arith.constant dense<0.000000e+00> : vector<8x128xf32>
    %199 = tpu.matmul %198, %172, %cst_52 {dimension_numbers = #tpu.dot_dimension_numbers<[1], [0], [0], [1], [0, 0, 1, 1], [], []>} : vector<8x32xf32>, vector<32x128xf32>, vector<8x128xf32> -> vector<8x128xf32>
    %200 = vector.broadcast %173 : vector<1x128xf32> to vector<8x128xf32>
    %201 = arith.addf %199, %200 : vector<8x128xf32>
    %202 = vector.extract_strided_slice %201 {offsets = [0, 0], sizes = [8, 34], strides = [1, 1]} : vector<8x128xf32> to vector<8x34xf32>
    %203 = vector.extract_strided_slice %201 {offsets = [0, 34], sizes = [8, 1], strides = [1, 1]} : vector<8x128xf32> to vector<8x1xf32>
    %204 = arith.negf %203 : vector<8x1xf32>
    %205 = math.exp %204 : vector<8x1xf32>
    %cst_53 = arith.constant 1.000000e+00 : f32
    %206 = vector.broadcast %cst_53 : f32 to vector<8x1xf32>
    %207 = arith.addf %206, %205 : vector<8x1xf32>
    %208 = arith.divf %206, %207 : vector<8x1xf32>
    %cst_54 = arith.constant 1.000000e+00 : f32
    %209 = vector.broadcast %cst_54 : f32 to vector<8x1xf32>
    %210 = arith.subf %209, %208 : vector<8x1xf32>
    %211 = tpu.concatenate %202, %208, %210, %174 in 1 : vector<8x34xf32>, vector<8x1xf32>, vector<8x1xf32>, vector<8x92xf32> -> vector<8x128xf32>
    %c0_55 = arith.constant 0 : index
    %c0_56 = arith.constant 0 : index
    %c0_57 = arith.constant 0 : index
    %212 = vector.load %arg14[%c0_55, %c0_56, %c0_57] : memref<6x8x128xf32, #tpu.memory_space<vmem>>, vector<1x8x128xf32>
    %213 = vector.shape_cast %212 : vector<1x8x128xf32> to vector<8x128xf32>
    %214 = vector.shape_cast %211 : vector<8x128xf32> to vector<1x8x128xf32>
    tpu.vector_store %arg14[%c0_55, %c0_56, %c0_57], %214 {strides = array<i32>} : memref<6x8x128xf32, #tpu.memory_space<vmem>>, vector<1x8x128xf32>,
    %cst_58 = arith.constant dense<0.000000e+00> : vector<8x128xf32>
    %215 = tpu.matmul %198, %169, %cst_58 {dimension_numbers = #tpu.dot_dimension_numbers<[1], [0], [0], [1], [0, 0, 1, 1], [], []>} : vector<8x32xf32>, vector<32x128xf32>, vector<8x128xf32> -> vector<8x128xf32>
    %216 = vector.broadcast %208 : vector<8x1xf32> to vector<8x128xf32>
    %217 = vector.broadcast %170 : vector<1x128xf32> to vector<8x128xf32>
    %218 = arith.mulf %216, %217 : vector<8x128xf32>
    %219 = arith.addf %215, %218 : vector<8x128xf32>
    %220 = vector.broadcast %171 : vector<1x128xf32> to vector<8x128xf32>
    %221 = arith.addf %219, %220 : vector<8x128xf32>
    %222 = vector.extract_strided_slice %221 {offsets = [0, 0], sizes = [8, 96], strides = [1, 1]} : vector<8x128xf32> to vector<8x96xf32>
    %223 = arith.negf %222 : vector<8x96xf32>
    %224 = math.exp %223 : vector<8x96xf32>
    %cst_59 = arith.constant 1.000000e+00 : f32
    %225 = vector.broadcast %cst_59 : f32 to vector<8x96xf32>
    %226 = arith.addf %225, %224 : vector<8x96xf32>
    %227 = arith.divf %225, %226 : vector<8x96xf32>
    %228 = vector.extract_strided_slice %221 {offsets = [0, 96], sizes = [8, 32], strides = [1, 1]} : vector<8x128xf32> to vector<8x32xf32>
    %229 = math.tanh %228 : vector<8x32xf32>
    %230 = vector.extract_strided_slice %227 {offsets = [0, 32], sizes = [8, 32], strides = [1, 1]} : vector<8x96xf32> to vector<8x32xf32>
    %231 = arith.mulf %230, %195 : vector<8x32xf32>
    %232 = vector.extract_strided_slice %227 {offsets = [0, 0], sizes = [8, 32], strides = [1, 1]} : vector<8x96xf32> to vector<8x32xf32>
    %233 = arith.mulf %232, %229 : vector<8x32xf32>
    %234 = arith.addf %231, %233 : vector<8x32xf32>
    %235 = vector.extract_strided_slice %227 {offsets = [0, 64], sizes = [8, 32], strides = [1, 1]} : vector<8x96xf32> to vector<8x32xf32>
    %236 = math.tanh %234 : vector<8x32xf32>
    %237 = arith.mulf %235, %236 : vector<8x32xf32>
    %cst_60 = arith.constant dense<0.000000e+00> : vector<8x128xf32>
    %238 = tpu.matmul %237, %172, %cst_60 {dimension_numbers = #tpu.dot_dimension_numbers<[1], [0], [0], [1], [0, 0, 1, 1], [], []>} : vector<8x32xf32>, vector<32x128xf32>, vector<8x128xf32> -> vector<8x128xf32>
    %239 = vector.broadcast %173 : vector<1x128xf32> to vector<8x128xf32>
    %240 = arith.addf %238, %239 : vector<8x128xf32>
    %241 = vector.extract_strided_slice %240 {offsets = [0, 0], sizes = [8, 34], strides = [1, 1]} : vector<8x128xf32> to vector<8x34xf32>
    %242 = vector.extract_strided_slice %240 {offsets = [0, 34], sizes = [8, 1], strides = [1, 1]} : vector<8x128xf32> to vector<8x1xf32>
    %243 = arith.negf %242 : vector<8x1xf32>
    %244 = math.exp %243 : vector<8x1xf32>
    %cst_61 = arith.constant 1.000000e+00 : f32
    %245 = vector.broadcast %cst_61 : f32 to vector<8x1xf32>
    %246 = arith.addf %245, %244 : vector<8x1xf32>
    %247 = arith.divf %245, %246 : vector<8x1xf32>
    %cst_62 = arith.constant 1.000000e+00 : f32
    %248 = vector.broadcast %cst_62 : f32 to vector<8x1xf32>
    %249 = arith.subf %248, %247 : vector<8x1xf32>
    %250 = tpu.concatenate %241, %247, %249, %174 in 1 : vector<8x34xf32>, vector<8x1xf32>, vector<8x1xf32>, vector<8x92xf32> -> vector<8x128xf32>
    %c1 = arith.constant 1 : index
    %c0_63 = arith.constant 0 : index
    %c0_64 = arith.constant 0 : index
    %251 = vector.load %arg14[%c1, %c0_63, %c0_64] : memref<6x8x128xf32, #tpu.memory_space<vmem>>, vector<1x8x128xf32>
    %252 = vector.shape_cast %251 : vector<1x8x128xf32> to vector<8x128xf32>
    %253 = vector.shape_cast %250 : vector<8x128xf32> to vector<1x8x128xf32>
    tpu.vector_store %arg14[%c1, %c0_63, %c0_64], %253 {strides = array<i32>} : memref<6x8x128xf32, #tpu.memory_space<vmem>>, vector<1x8x128xf32>,
    %cst_65 = arith.constant dense<0.000000e+00> : vector<8x128xf32>
    %254 = tpu.matmul %237, %169, %cst_65 {dimension_numbers = #tpu.dot_dimension_numbers<[1], [0], [0], [1], [0, 0, 1, 1], [], []>} : vector<8x32xf32>, vector<32x128xf32>, vector<8x128xf32> -> vector<8x128xf32>
    %255 = vector.broadcast %247 : vector<8x1xf32> to vector<8x128xf32>
    %256 = vector.broadcast %170 : vector<1x128xf32> to vector<8x128xf32>
    %257 = arith.mulf %255, %256 : vector<8x128xf32>
    %258 = arith.addf %254, %257 : vector<8x128xf32>
    %259 = vector.broadcast %171 : vector<1x128xf32> to vector<8x128xf32>
    %260 = arith.addf %258, %259 : vector<8x128xf32>
    %261 = vector.extract_strided_slice %260 {offsets = [0, 0], sizes = [8, 96], strides = [1, 1]} : vector<8x128xf32> to vector<8x96xf32>
    %262 = arith.negf %261 : vector<8x96xf32>
    %263 = math.exp %262 : vector<8x96xf32>
    %cst_66 = arith.constant 1.000000e+00 : f32
    %264 = vector.broadcast %cst_66 : f32 to vector<8x96xf32>
    %265 = arith.addf %264, %263 : vector<8x96xf32>
    %266 = arith.divf %264, %265 : vector<8x96xf32>
    %267 = vector.extract_strided_slice %260 {offsets = [0, 96], sizes = [8, 32], strides = [1, 1]} : vector<8x128xf32> to vector<8x32xf32>
    %268 = math.tanh %267 : vector<8x32xf32>
    %269 = vector.extract_strided_slice %266 {offsets = [0, 32], sizes = [8, 32], strides = [1, 1]} : vector<8x96xf32> to vector<8x32xf32>
    %270 = arith.mulf %269, %234 : vector<8x32xf32>
    %271 = vector.extract_strided_slice %266 {offsets = [0, 0], sizes = [8, 32], strides = [1, 1]} : vector<8x96xf32> to vector<8x32xf32>
    %272 = arith.mulf %271, %268 : vector<8x32xf32>
    %273 = arith.addf %270, %272 : vector<8x32xf32>
    %274 = vector.extract_strided_slice %266 {offsets = [0, 64], sizes = [8, 32], strides = [1, 1]} : vector<8x96xf32> to vector<8x32xf32>
    %275 = math.tanh %273 : vector<8x32xf32>
    %276 = arith.mulf %274, %275 : vector<8x32xf32>
    %cst_67 = arith.constant dense<0.000000e+00> : vector<8x128xf32>
    %277 = tpu.matmul %276, %172, %cst_67 {dimension_numbers = #tpu.dot_dimension_numbers<[1], [0], [0], [1], [0, 0, 1, 1], [], []>} : vector<8x32xf32>, vector<32x128xf32>, vector<8x128xf32> -> vector<8x128xf32>
    %278 = vector.broadcast %173 : vector<1x128xf32> to vector<8x128xf32>
    %279 = arith.addf %277, %278 : vector<8x128xf32>
    %280 = vector.extract_strided_slice %279 {offsets = [0, 0], sizes = [8, 34], strides = [1, 1]} : vector<8x128xf32> to vector<8x34xf32>
    %281 = vector.extract_strided_slice %279 {offsets = [0, 34], sizes = [8, 1], strides = [1, 1]} : vector<8x128xf32> to vector<8x1xf32>
    %282 = arith.negf %281 : vector<8x1xf32>
    %283 = math.exp %282 : vector<8x1xf32>
    %cst_68 = arith.constant 1.000000e+00 : f32
    %284 = vector.broadcast %cst_68 : f32 to vector<8x1xf32>
    %285 = arith.addf %284, %283 : vector<8x1xf32>
    %286 = arith.divf %284, %285 : vector<8x1xf32>
    %cst_69 = arith.constant 1.000000e+00 : f32
    %287 = vector.broadcast %cst_69 : f32 to vector<8x1xf32>
    %288 = arith.subf %287, %286 : vector<8x1xf32>
    %289 = tpu.concatenate %280, %286, %288, %174 in 1 : vector<8x34xf32>, vector<8x1xf32>, vector<8x1xf32>, vector<8x92xf32> -> vector<8x128xf32>
    %c2 = arith.constant 2 : index
    %c0_70 = arith.constant 0 : index
    %c0_71 = arith.constant 0 : index
    %290 = vector.load %arg14[%c2, %c0_70, %c0_71] : memref<6x8x128xf32, #tpu.memory_space<vmem>>, vector<1x8x128xf32>
    %291 = vector.shape_cast %290 : vector<1x8x128xf32> to vector<8x128xf32>
    %292 = vector.shape_cast %289 : vector<8x128xf32> to vector<1x8x128xf32>
    tpu.vector_store %arg14[%c2, %c0_70, %c0_71], %292 {strides = array<i32>} : memref<6x8x128xf32, #tpu.memory_space<vmem>>, vector<1x8x128xf32>,
    %cst_72 = arith.constant dense<0.000000e+00> : vector<8x128xf32>
    %293 = tpu.matmul %276, %169, %cst_72 {dimension_numbers = #tpu.dot_dimension_numbers<[1], [0], [0], [1], [0, 0, 1, 1], [], []>} : vector<8x32xf32>, vector<32x128xf32>, vector<8x128xf32> -> vector<8x128xf32>
    %294 = vector.broadcast %286 : vector<8x1xf32> to vector<8x128xf32>
    %295 = vector.broadcast %170 : vector<1x128xf32> to vector<8x128xf32>
    %296 = arith.mulf %294, %295 : vector<8x128xf32>
    %297 = arith.addf %293, %296 : vector<8x128xf32>
    %298 = vector.broadcast %171 : vector<1x128xf32> to vector<8x128xf32>
    %299 = arith.addf %297, %298 : vector<8x128xf32>
    %300 = vector.extract_strided_slice %299 {offsets = [0, 0], sizes = [8, 96], strides = [1, 1]} : vector<8x128xf32> to vector<8x96xf32>
    %301 = arith.negf %300 : vector<8x96xf32>
    %302 = math.exp %301 : vector<8x96xf32>
    %cst_73 = arith.constant 1.000000e+00 : f32
    %303 = vector.broadcast %cst_73 : f32 to vector<8x96xf32>
    %304 = arith.addf %303, %302 : vector<8x96xf32>
    %305 = arith.divf %303, %304 : vector<8x96xf32>
    %306 = vector.extract_strided_slice %299 {offsets = [0, 96], sizes = [8, 32], strides = [1, 1]} : vector<8x128xf32> to vector<8x32xf32>
    %307 = math.tanh %306 : vector<8x32xf32>
    %308 = vector.extract_strided_slice %305 {offsets = [0, 32], sizes = [8, 32], strides = [1, 1]} : vector<8x96xf32> to vector<8x32xf32>
    %309 = arith.mulf %308, %273 : vector<8x32xf32>
    %310 = vector.extract_strided_slice %305 {offsets = [0, 0], sizes = [8, 32], strides = [1, 1]} : vector<8x96xf32> to vector<8x32xf32>
    %311 = arith.mulf %310, %307 : vector<8x32xf32>
    %312 = arith.addf %309, %311 : vector<8x32xf32>
    %313 = vector.extract_strided_slice %305 {offsets = [0, 64], sizes = [8, 32], strides = [1, 1]} : vector<8x96xf32> to vector<8x32xf32>
    %314 = math.tanh %312 : vector<8x32xf32>
    %315 = arith.mulf %313, %314 : vector<8x32xf32>
    %cst_74 = arith.constant dense<0.000000e+00> : vector<8x128xf32>
    %316 = tpu.matmul %315, %172, %cst_74 {dimension_numbers = #tpu.dot_dimension_numbers<[1], [0], [0], [1], [0, 0, 1, 1], [], []>} : vector<8x32xf32>, vector<32x128xf32>, vector<8x128xf32> -> vector<8x128xf32>
    %317 = vector.broadcast %173 : vector<1x128xf32> to vector<8x128xf32>
    %318 = arith.addf %316, %317 : vector<8x128xf32>
    %319 = vector.extract_strided_slice %318 {offsets = [0, 0], sizes = [8, 34], strides = [1, 1]} : vector<8x128xf32> to vector<8x34xf32>
    %320 = vector.extract_strided_slice %318 {offsets = [0, 34], sizes = [8, 1], strides = [1, 1]} : vector<8x128xf32> to vector<8x1xf32>
    %321 = arith.negf %320 : vector<8x1xf32>
    %322 = math.exp %321 : vector<8x1xf32>
    %cst_75 = arith.constant 1.000000e+00 : f32
    %323 = vector.broadcast %cst_75 : f32 to vector<8x1xf32>
    %324 = arith.addf %323, %322 : vector<8x1xf32>
    %325 = arith.divf %323, %324 : vector<8x1xf32>
    %cst_76 = arith.constant 1.000000e+00 : f32
    %326 = vector.broadcast %cst_76 : f32 to vector<8x1xf32>
    %327 = arith.subf %326, %325 : vector<8x1xf32>
    %328 = tpu.concatenate %319, %325, %327, %174 in 1 : vector<8x34xf32>, vector<8x1xf32>, vector<8x1xf32>, vector<8x92xf32> -> vector<8x128xf32>
    %c3 = arith.constant 3 : index
    %c0_77 = arith.constant 0 : index
    %c0_78 = arith.constant 0 : index
    %329 = vector.load %arg14[%c3, %c0_77, %c0_78] : memref<6x8x128xf32, #tpu.memory_space<vmem>>, vector<1x8x128xf32>
    %330 = vector.shape_cast %329 : vector<1x8x128xf32> to vector<8x128xf32>
    %331 = vector.shape_cast %328 : vector<8x128xf32> to vector<1x8x128xf32>
    tpu.vector_store %arg14[%c3, %c0_77, %c0_78], %331 {strides = array<i32>} : memref<6x8x128xf32, #tpu.memory_space<vmem>>, vector<1x8x128xf32>,
    %cst_79 = arith.constant dense<0.000000e+00> : vector<8x128xf32>
    %332 = tpu.matmul %315, %169, %cst_79 {dimension_numbers = #tpu.dot_dimension_numbers<[1], [0], [0], [1], [0, 0, 1, 1], [], []>} : vector<8x32xf32>, vector<32x128xf32>, vector<8x128xf32> -> vector<8x128xf32>
    %333 = vector.broadcast %325 : vector<8x1xf32> to vector<8x128xf32>
    %334 = vector.broadcast %170 : vector<1x128xf32> to vector<8x128xf32>
    %335 = arith.mulf %333, %334 : vector<8x128xf32>
    %336 = arith.addf %332, %335 : vector<8x128xf32>
    %337 = vector.broadcast %171 : vector<1x128xf32> to vector<8x128xf32>
    %338 = arith.addf %336, %337 : vector<8x128xf32>
    %339 = vector.extract_strided_slice %338 {offsets = [0, 0], sizes = [8, 96], strides = [1, 1]} : vector<8x128xf32> to vector<8x96xf32>
    %340 = arith.negf %339 : vector<8x96xf32>
    %341 = math.exp %340 : vector<8x96xf32>
    %cst_80 = arith.constant 1.000000e+00 : f32
    %342 = vector.broadcast %cst_80 : f32 to vector<8x96xf32>
    %343 = arith.addf %342, %341 : vector<8x96xf32>
    %344 = arith.divf %342, %343 : vector<8x96xf32>
    %345 = vector.extract_strided_slice %338 {offsets = [0, 96], sizes = [8, 32], strides = [1, 1]} : vector<8x128xf32> to vector<8x32xf32>
    %346 = math.tanh %345 : vector<8x32xf32>
    %347 = vector.extract_strided_slice %344 {offsets = [0, 32], sizes = [8, 32], strides = [1, 1]} : vector<8x96xf32> to vector<8x32xf32>
    %348 = arith.mulf %347, %312 : vector<8x32xf32>
    %349 = vector.extract_strided_slice %344 {offsets = [0, 0], sizes = [8, 32], strides = [1, 1]} : vector<8x96xf32> to vector<8x32xf32>
    %350 = arith.mulf %349, %346 : vector<8x32xf32>
    %351 = arith.addf %348, %350 : vector<8x32xf32>
    %352 = vector.extract_strided_slice %344 {offsets = [0, 64], sizes = [8, 32], strides = [1, 1]} : vector<8x96xf32> to vector<8x32xf32>
    %353 = math.tanh %351 : vector<8x32xf32>
    %354 = arith.mulf %352, %353 : vector<8x32xf32>
    %cst_81 = arith.constant dense<0.000000e+00> : vector<8x128xf32>
    %355 = tpu.matmul %354, %172, %cst_81 {dimension_numbers = #tpu.dot_dimension_numbers<[1], [0], [0], [1], [0, 0, 1, 1], [], []>} : vector<8x32xf32>, vector<32x128xf32>, vector<8x128xf32> -> vector<8x128xf32>
    %356 = vector.broadcast %173 : vector<1x128xf32> to vector<8x128xf32>
    %357 = arith.addf %355, %356 : vector<8x128xf32>
    %358 = vector.extract_strided_slice %357 {offsets = [0, 0], sizes = [8, 34], strides = [1, 1]} : vector<8x128xf32> to vector<8x34xf32>
    %359 = vector.extract_strided_slice %357 {offsets = [0, 34], sizes = [8, 1], strides = [1, 1]} : vector<8x128xf32> to vector<8x1xf32>
    %360 = arith.negf %359 : vector<8x1xf32>
    %361 = math.exp %360 : vector<8x1xf32>
    %cst_82 = arith.constant 1.000000e+00 : f32
    %362 = vector.broadcast %cst_82 : f32 to vector<8x1xf32>
    %363 = arith.addf %362, %361 : vector<8x1xf32>
    %364 = arith.divf %362, %363 : vector<8x1xf32>
    %cst_83 = arith.constant 1.000000e+00 : f32
    %365 = vector.broadcast %cst_83 : f32 to vector<8x1xf32>
    %366 = arith.subf %365, %364 : vector<8x1xf32>
    %367 = tpu.concatenate %358, %364, %366, %174 in 1 : vector<8x34xf32>, vector<8x1xf32>, vector<8x1xf32>, vector<8x92xf32> -> vector<8x128xf32>
    %c4 = arith.constant 4 : index
    %c0_84 = arith.constant 0 : index
    %c0_85 = arith.constant 0 : index
    %368 = vector.load %arg14[%c4, %c0_84, %c0_85] : memref<6x8x128xf32, #tpu.memory_space<vmem>>, vector<1x8x128xf32>
    %369 = vector.shape_cast %368 : vector<1x8x128xf32> to vector<8x128xf32>
    %370 = vector.shape_cast %367 : vector<8x128xf32> to vector<1x8x128xf32>
    tpu.vector_store %arg14[%c4, %c0_84, %c0_85], %370 {strides = array<i32>} : memref<6x8x128xf32, #tpu.memory_space<vmem>>, vector<1x8x128xf32>,
    %cst_86 = arith.constant dense<0.000000e+00> : vector<8x128xf32>
    %371 = tpu.matmul %354, %169, %cst_86 {dimension_numbers = #tpu.dot_dimension_numbers<[1], [0], [0], [1], [0, 0, 1, 1], [], []>} : vector<8x32xf32>, vector<32x128xf32>, vector<8x128xf32> -> vector<8x128xf32>
    %372 = vector.broadcast %364 : vector<8x1xf32> to vector<8x128xf32>
    %373 = vector.broadcast %170 : vector<1x128xf32> to vector<8x128xf32>
    %374 = arith.mulf %372, %373 : vector<8x128xf32>
    %375 = arith.addf %371, %374 : vector<8x128xf32>
    %376 = vector.broadcast %171 : vector<1x128xf32> to vector<8x128xf32>
    %377 = arith.addf %375, %376 : vector<8x128xf32>
    %378 = vector.extract_strided_slice %377 {offsets = [0, 0], sizes = [8, 96], strides = [1, 1]} : vector<8x128xf32> to vector<8x96xf32>
    %379 = arith.negf %378 : vector<8x96xf32>
    %380 = math.exp %379 : vector<8x96xf32>
    %cst_87 = arith.constant 1.000000e+00 : f32
    %381 = vector.broadcast %cst_87 : f32 to vector<8x96xf32>
    %382 = arith.addf %381, %380 : vector<8x96xf32>
    %383 = arith.divf %381, %382 : vector<8x96xf32>
    %384 = vector.extract_strided_slice %377 {offsets = [0, 96], sizes = [8, 32], strides = [1, 1]} : vector<8x128xf32> to vector<8x32xf32>
    %385 = math.tanh %384 : vector<8x32xf32>
    %386 = vector.extract_strided_slice %383 {offsets = [0, 32], sizes = [8, 32], strides = [1, 1]} : vector<8x96xf32> to vector<8x32xf32>
    %387 = arith.mulf %386, %351 : vector<8x32xf32>
    %388 = vector.extract_strided_slice %383 {offsets = [0, 0], sizes = [8, 32], strides = [1, 1]} : vector<8x96xf32> to vector<8x32xf32>
    %389 = arith.mulf %388, %385 : vector<8x32xf32>
    %390 = arith.addf %387, %389 : vector<8x32xf32>
    %391 = vector.extract_strided_slice %383 {offsets = [0, 64], sizes = [8, 32], strides = [1, 1]} : vector<8x96xf32> to vector<8x32xf32>
    %392 = math.tanh %390 : vector<8x32xf32>
    %393 = arith.mulf %391, %392 : vector<8x32xf32>
    %cst_88 = arith.constant dense<0.000000e+00> : vector<8x128xf32>
    %394 = tpu.matmul %393, %172, %cst_88 {dimension_numbers = #tpu.dot_dimension_numbers<[1], [0], [0], [1], [0, 0, 1, 1], [], []>} : vector<8x32xf32>, vector<32x128xf32>, vector<8x128xf32> -> vector<8x128xf32>
    %395 = vector.broadcast %173 : vector<1x128xf32> to vector<8x128xf32>
    %396 = arith.addf %394, %395 : vector<8x128xf32>
    %397 = vector.extract_strided_slice %396 {offsets = [0, 0], sizes = [8, 34], strides = [1, 1]} : vector<8x128xf32> to vector<8x34xf32>
    %398 = vector.extract_strided_slice %396 {offsets = [0, 34], sizes = [8, 1], strides = [1, 1]} : vector<8x128xf32> to vector<8x1xf32>
    %399 = arith.negf %398 : vector<8x1xf32>
    %400 = math.exp %399 : vector<8x1xf32>
    %cst_89 = arith.constant 1.000000e+00 : f32
    %401 = vector.broadcast %cst_89 : f32 to vector<8x1xf32>
    %402 = arith.addf %401, %400 : vector<8x1xf32>
    %403 = arith.divf %401, %402 : vector<8x1xf32>
    %cst_90 = arith.constant 1.000000e+00 : f32
    %404 = vector.broadcast %cst_90 : f32 to vector<8x1xf32>
    %405 = arith.subf %404, %403 : vector<8x1xf32>
    %406 = tpu.concatenate %397, %403, %405, %174 in 1 : vector<8x34xf32>, vector<8x1xf32>, vector<8x1xf32>, vector<8x92xf32> -> vector<8x128xf32>
    %c5 = arith.constant 5 : index
    %c0_91 = arith.constant 0 : index
    %c0_92 = arith.constant 0 : index
    %407 = vector.load %arg14[%c5, %c0_91, %c0_92] : memref<6x8x128xf32, #tpu.memory_space<vmem>>, vector<1x8x128xf32>
    %408 = vector.shape_cast %407 : vector<1x8x128xf32> to vector<8x128xf32>
    %409 = vector.shape_cast %406 : vector<8x128xf32> to vector<1x8x128xf32>
    tpu.vector_store %arg14[%c5, %c0_91, %c0_92], %409 {strides = array<i32>} : memref<6x8x128xf32, #tpu.memory_space<vmem>>, vector<1x8x128xf32>,
    return
  }
}

</mosaic_0001>

<llo_original>
// kernel: lstm_forward.1
$region0: #{lstm_forward.1}
  #allocation0 [shape = 'u32[]', space=smem, size = 0x4, offset = 0x4, fixed_abs, tag = 'smem constant byte address 0x4 - core index']
  #allocation1 [shape = 'u32[72,128]{1,0:T(1,128)}', space=vmem, size = 0x9000, scoped, tag = 'internal scratch']
  %s0 = inlined_call_operand.vmem [shape: f32[64,34], index: 0, kind: input, shape index: {}]
  %s1 = inlined_call_operand.vmem [shape: f32[34,64], index: 1, kind: input, shape index: {}]
  %s2 = inlined_call_operand.vmem [shape: f32[16,64], index: 2, kind: input, shape index: {}]
  %s3 = inlined_call_operand.vmem [shape: f32[1,64], index: 3, kind: input, shape index: {}]
  %s4 = inlined_call_operand.vmem [shape: f32[16,32], index: 4, kind: input, shape index: {}]
  %s5 = inlined_call_operand.vmem [shape: f32[1,32], index: 5, kind: input, shape index: {}]
  %s6 = inlined_call_operand.vmem [shape: f32[34,128], index: 6, kind: input, shape index: {}]
  %s7 = inlined_call_operand.vmem [shape: f32[32,128], index: 7, kind: input, shape index: {}]
  %s8 = inlined_call_operand.vmem [shape: f32[1,128], index: 8, kind: input, shape index: {}]
  %s9 = inlined_call_operand.vmem [shape: f32[32,128], index: 9, kind: input, shape index: {}]
  %s10 = inlined_call_operand.vmem [shape: f32[1,128], index: 10, kind: input, shape index: {}]
  %s11 = inlined_call_operand.vmem [shape: f32[1,128], index: 11, kind: input, shape index: {}]
  %s12 = inlined_call_operand.vmem [shape: f32[32,128], index: 12, kind: input, shape index: {}]
  %s13 = inlined_call_operand.vmem [shape: f32[1,128], index: 13, kind: input, shape index: {}]
  %s14 = inlined_call_operand.vmem [shape: f32[6,8,128], index: 14, kind: output, shape index: {}]
  %s15 = sld [smem:[#allocation0]]
  $region66: #{lstm_forward.1} parent=0
    _
  %s17 = ssub.s32 1, %s15
  %s18 = scalar_select 0, %s17, %s15
  // Predicated region
  $region2: #{lstm_forward.1} parent=0 // pred_check
    _
  $region3: #{lstm_forward.1} parent=0 // pred_check_branch
    %20 = sbr.rel (0) target = $region5
  $region4: #{lstm_forward.1} parent=0 // pred_region
    _
  $region5: #{lstm_forward.1} parent=0 // pred_fallthru
    _
  // Predicated region
  $region6: #{lstm_forward.1} parent=0 // pred_check
    _
  $region7: #{lstm_forward.1} parent=0 // pred_check_branch
    %22 = sbr.rel (0) target = $region9
  $region8: #{lstm_forward.1} parent=0 // pred_region
    _
  $region9: #{lstm_forward.1} parent=0 // pred_fallthru
    _
  // Predicated region
  $region10: #{lstm_forward.1} parent=0 // pred_check
    _
  $region11: #{lstm_forward.1} parent=0 // pred_check_branch
    %24 = sbr.rel (0) target = $region13
  $region12: #{lstm_forward.1} parent=0 // pred_region
    _
  $region13: #{lstm_forward.1} parent=0 // pred_fallthru
    _
  // Predicated region
  $region14: #{lstm_forward.1} parent=0 // pred_check
    _
  $region15: #{lstm_forward.1} parent=0 // pred_check_branch
    %26 = sbr.rel (0) target = $region17
  $region16: #{lstm_forward.1} parent=0 // pred_region
    _
  $region17: #{lstm_forward.1} parent=0 // pred_fallthru
    _
  // Predicated region
  $region18: #{lstm_forward.1} parent=0 // pred_check
    _
  $region19: #{lstm_forward.1} parent=0 // pred_check_branch
    %28 = sbr.rel (0) target = $region21
  $region20: #{lstm_forward.1} parent=0 // pred_region
    _
  $region21: #{lstm_forward.1} parent=0 // pred_fallthru
    _
  // Predicated region
  $region22: #{lstm_forward.1} parent=0 // pred_check
    _
  $region23: #{lstm_forward.1} parent=0 // pred_check_branch
    %30 = sbr.rel (0) target = $region25
  $region24: #{lstm_forward.1} parent=0 // pred_region
    _
  $region25: #{lstm_forward.1} parent=0 // pred_fallthru
    _
  // Predicated region
  $region26: #{lstm_forward.1} parent=0 // pred_check
    _
  $region27: #{lstm_forward.1} parent=0 // pred_check_branch
    %32 = sbr.rel (0) target = $region29
  $region28: #{lstm_forward.1} parent=0 // pred_region
    _
  $region29: #{lstm_forward.1} parent=0 // pred_fallthru
    _
  // Predicated region
  $region30: #{lstm_forward.1} parent=0 // pred_check
    _
  $region31: #{lstm_forward.1} parent=0 // pred_check_branch
    %34 = sbr.rel (0) target = $region33
  $region32: #{lstm_forward.1} parent=0 // pred_region
    _
  $region33: #{lstm_forward.1} parent=0 // pred_fallthru
    _
  // Predicated region
  $region34: #{lstm_forward.1} parent=0 // pred_check
    _
  $region35: #{lstm_forward.1} parent=0 // pred_check_branch
    %36 = sbr.rel (0) target = $region37
  $region36: #{lstm_forward.1} parent=0 // pred_region
    _
  $region37: #{lstm_forward.1} parent=0 // pred_fallthru
    _
  // Predicated region
  $region38: #{lstm_forward.1} parent=0 // pred_check
    _
  $region39: #{lstm_forward.1} parent=0 // pred_check_branch
    %38 = sbr.rel (0) target = $region41
  $region40: #{lstm_forward.1} parent=0 // pred_region
    _
  $region41: #{lstm_forward.1} parent=0 // pred_fallthru
    _
  // Predicated region
  $region42: #{lstm_forward.1} parent=0 // pred_check
    _
  $region43: #{lstm_forward.1} parent=0 // pred_check_branch
    %40 = sbr.rel (0) target = $region45
  $region44: #{lstm_forward.1} parent=0 // pred_region
    _
  $region45: #{lstm_forward.1} parent=0 // pred_fallthru
    _
  // Predicated region
  $region46: #{lstm_forward.1} parent=0 // pred_check
    _
  $region47: #{lstm_forward.1} parent=0 // pred_check_branch
    %42 = sbr.rel (0) target = $region49
  $region48: #{lstm_forward.1} parent=0 // pred_region
    _
  $region49: #{lstm_forward.1} parent=0 // pred_fallthru
    _
  // Predicated region
  $region50: #{lstm_forward.1} parent=0 // pred_check
    _
  $region51: #{lstm_forward.1} parent=0 // pred_check_branch
    %44 = sbr.rel (0) target = $region53
  $region52: #{lstm_forward.1} parent=0 // pred_region
    _
  $region53: #{lstm_forward.1} parent=0 // pred_fallthru
    _
  // Predicated region
  $region54: #{lstm_forward.1} parent=0 // pred_check
    _
  $region55: #{lstm_forward.1} parent=0 // pred_check_branch
    %46 = sbr.rel (0) target = $region57
  $region56: #{lstm_forward.1} parent=0 // pred_region
    _
  $region57: #{lstm_forward.1} parent=0 // pred_fallthru
    _
  %v47 = vld [vmem:[%s0] sm:$0xff]
  %v48 = vld [vmem:[%s0 + $0x8] sm:$0xff]
  %v49 = vld [vmem:[%s0 + $0x10] sm:$0xff]
  %v50 = vld [vmem:[%s0 + $0x18] sm:$0xff]
  %v51 = vld [vmem:[%s0 + $0x20] sm:$0xff]
  %v52 = vld [vmem:[%s0 + $0x28] sm:$0xff]
  %v53 = vld [vmem:[%s0 + $0x30] sm:$0xff]
  %v54 = vld [vmem:[%s0 + $0x38] sm:$0xff]
  %v55 = vld [vmem:[%s1] sm:$0xff]
  %v56 = vld [vmem:[%s1 + $0x8] sm:$0xff]
  %v57 = vld [vmem:[%s1 + $0x10] sm:$0xff]
  %v58 = vld [vmem:[%s1 + $0x18] sm:$0xff]
  %v59 = vld [vmem:[%s1 + $0x20] sm:$0x3]
  %v60 = vld [vmem:[%s3] sm:$0x1]
  %v62 = vperm.slane %v60, 0
  %vm64 = vcmask 277504
  %v66 = vsel %vm64, %v47, 0
  %v69 = vsel %vm64, %v48, 0
  %v72 = vsel %vm64, %v49, 0
  %v75 = vsel %vm64, %v50, 0
  %v78 = vsel %vm64, %v51, 0
  %v81 = vsel %vm64, %v52, 0
  %v84 = vsel %vm64, %v53, 0
  %v87 = vsel %vm64, %v54, 0
  %vm89 = vcmask 1041408
  %v91 = vsel %vm89, %v59, 0
  %93 = vmatpush.msra.mxu0 0.0
  %94 = vmatpush.msra.mxu0 0.0
  %95 = vmatpush.msra.mxu0 0.0
  %96 = vmatpush.msra.mxu0 0.0
  %97 = vmatpush.msra.mxu0 0.0
  %98 = vmatpush.msra.mxu0 0.0
  %99 = vmatpush.msra.mxu0 0.0
  %100 = vmatpush.msra.mxu0 0.0
  %101 = vmatpush.msra.mxu0 0.0
  %102 = vmatpush.msra.mxu0 0.0
  %103 = vmatpush.msra.mxu0 0.0
  %104 = vmatpush.msra.mxu0 %v91
  %105 = vmatpush.msra.mxu0 %v58
  %106 = vmatpush.msra.mxu0 %v57
  %107 = vmatpush.msra.mxu0 %v56
  %108 = vmatpush.msra.mxu0 %v55
  %109 = vmatmul.f32.gmra.mxu0 %v66
  %v110 = vpop.f32.mrf.mxu0
  %v111 = vadd.f32 %v62, %v110
  %112 = vmatmul.f32.gmra.mxu0 %v69
  %v113 = vpop.f32.mrf.mxu0
  %v114 = vadd.f32 %v62, %v113
  %115 = vmatmul.f32.gmra.mxu0 %v72
  %v116 = vpop.f32.mrf.mxu0
  %v117 = vadd.f32 %v62, %v116
  %118 = vmatmul.f32.gmra.mxu0 %v75
  %v119 = vpop.f32.mrf.mxu0
  %v120 = vadd.f32 %v62, %v119
  %121 = vmatmul.f32.gmra.mxu0 %v78
  %v122 = vpop.f32.mrf.mxu0
  %v123 = vadd.f32 %v62, %v122
  %124 = vmatmul.f32.gmra.mxu0 %v81
  %v125 = vpop.f32.mrf.mxu0
  %v126 = vadd.f32 %v62, %v125
  %127 = vmatmul.f32.gmra.mxu0 %v84
  %v128 = vpop.f32.mrf.mxu0
  %v129 = vadd.f32 %v62, %v128
  %130 = vmatmul.f32.gmra.mxu0 %v87
  %v131 = vpop.f32.mrf.mxu0
  %v132 = vadd.f32 %v62, %v131
  %133 = vdwg.mxu0
  %v134 = vld [vmem:[%s2] sm:$0xff]
  %v135 = vld [vmem:[%s2 + $0x8] sm:$0xff]
  %vm136 = vcmask 130048
  %v138 = vsel %vm136, 0.0, 0
  %140 = vmatpush.msra.mxu0 0.0
  %141 = vmatpush.msra.mxu0 0.0
  %142 = vmatpush.msra.mxu0 0.0
  %143 = vmatpush.msra.mxu0 0.0
  %144 = vmatpush.msra.mxu0 0.0
  %145 = vmatpush.msra.mxu0 0.0
  %146 = vmatpush.msra.mxu0 0.0
  %147 = vmatpush.msra.mxu0 0.0
  %148 = vmatpush.msra.mxu0 0.0
  %149 = vmatpush.msra.mxu0 0.0
  %150 = vmatpush.msra.mxu0 0.0
  %151 = vmatpush.msra.mxu0 0.0
  %152 = vmatpush.msra.mxu0 0.0
  %153 = vmatpush.msra.mxu0 0.0
  %154 = vmatpush.msra.mxu0 %v135
  %155 = vmatpush.msra.mxu0 %v134
  %156 = vmatmul.f32.gmra.mxu0 %v138
  %v157 = vpop.f32.mrf.mxu0
  %v158 = vadd.f32 0.0, %v157
  %159 = vdwg.mxu0
  %v160 = vadd.f32 %v111, %v158
  %v161 = vxor.u32 %v160, 2147483648
  %v162 = vmul.f32 %v161, 1.442695
  %v163 = vpow.pop %v162
  %v164 = vadd.f32 %v163, 1.0
  %v165 = vrcp.pop %v164
  %v166 = vmul.f32 %v164, %v165
  %v167 = vsub.f32 1.0, %v166
  %v168 = vmul.f32 %v165, %v167
  %v169 = vadd.f32 %v165, %v168
  %vm170 = vweird.f32 %v164
  %vm171 = vweird.f32 %v165
  %vm172 = vmor %vm170, %vm171
  %v173 = vsel %vm172, %v165, %v169
  %v174 = vand.u32 2147483647, %v164
  %vm175 = vcmp.eq.f32.partialorder %v174, 8.507059e+37
  %v176 = vand.u32 %v164, 2147483648
  %v177 = vor.u32 1.1754944e-38, %v176
  %v178 = vsel %vm175, %v177, %v173
  %v179 = vmul.f32 1.0, %v178
  %v180 = vtanh.pop %v160
  %v181 = vmul.f32 %v179, 0.0
  %183 = vrot.lane.b32.xlu0 %v180, 80
  %v184 = vpop.permute.xlu0 %183
  %v186 = vmul.f32 %v179, %v184
  %188 = vrot.lane.b32.xlu0 %v186, 16
  %v189 = vpop.permute.xlu0 %188
  %v191 = vadd.f32 %v181, %v189
  %v192 = vtanh.pop %v191
  %194 = vrot.lane.b32.xlu0 %v192, 16
  %v195 = vpop.permute.xlu0 %194
  %v197 = vmul.f32 %v179, %v195
  %199 = vrot.lane.b32.xlu0 %v197, 96
  %v200 = vpop.permute.xlu0 %199
  %v201 = vsel %vm136, %v200, 0
  %203 = vmatpush.msra.mxu0 0.0
  %204 = vmatpush.msra.mxu0 0.0
  %205 = vmatpush.msra.mxu0 0.0
  %206 = vmatpush.msra.mxu0 0.0
  %207 = vmatpush.msra.mxu0 0.0
  %208 = vmatpush.msra.mxu0 0.0
  %209 = vmatpush.msra.mxu0 0.0
  %210 = vmatpush.msra.mxu0 0.0
  %211 = vmatpush.msra.mxu0 0.0
  %212 = vmatpush.msra.mxu0 0.0
  %213 = vmatpush.msra.mxu0 0.0
  %214 = vmatpush.msra.mxu0 0.0
  %215 = vmatpush.msra.mxu0 0.0
  %216 = vmatpush.msra.mxu0 0.0
  %217 = vmatpush.msra.mxu0 %v135
  %218 = vmatpush.msra.mxu0 %v134
  %219 = vmatmul.f32.gmra.mxu0 %v201
  %v220 = vpop.f32.mrf.mxu0
  %v221 = vadd.f32 0.0, %v220
  %222 = vdwg.mxu0
  %v223 = vadd.f32 %v114, %v221
  %v224 = vxor.u32 %v223, 2147483648
  %v225 = vmul.f32 %v224, 1.442695
  %v226 = vpow.pop %v225
  %v227 = vadd.f32 %v226, 1.0
  %v228 = vrcp.pop %v227
  %v229 = vmul.f32 %v227, %v228
  %v230 = vsub.f32 1.0, %v229
  %v231 = vmul.f32 %v228, %v230
  %v232 = vadd.f32 %v228, %v231
  %vm233 = vweird.f32 %v227
  %vm234 = vweird.f32 %v228
  %vm235 = vmor %vm233, %vm234
  %v236 = vsel %vm235, %v228, %v232
  %v237 = vand.u32 2147483647, %v227
  %vm238 = vcmp.eq.f32.partialorder %v237, 8.507059e+37
  %v239 = vand.u32 %v227, 2147483648
  %v240 = vor.u32 1.1754944e-38, %v239
  %v241 = vsel %vm238, %v240, %v236
  %v242 = vmul.f32 1.0, %v241
  %v243 = vtanh.pop %v223
  %v244 = vmul.f32 %v242, %v191
  %246 = vrot.lane.b32.xlu0 %v243, 80
  %v247 = vpop.permute.xlu0 %246
  %v249 = vmul.f32 %v242, %v247
  %251 = vrot.lane.b32.xlu0 %v249, 16
  %v252 = vpop.permute.xlu0 %251
  %v254 = vadd.f32 %v244, %v252
  %v255 = vtanh.pop %v254
  %257 = vrot.lane.b32.xlu0 %v255, 16
  %v258 = vpop.permute.xlu0 %257
  %v260 = vmul.f32 %v242, %v258
  %262 = vrot.lane.b32.xlu0 %v260, 96
  %v263 = vpop.permute.xlu0 %262
  %v264 = vsel %vm136, %v263, 0
  %266 = vmatpush.msra.mxu0 0.0
  %267 = vmatpush.msra.mxu0 0.0
  %268 = vmatpush.msra.mxu0 0.0
  %269 = vmatpush.msra.mxu0 0.0
  %270 = vmatpush.msra.mxu0 0.0
  %271 = vmatpush.msra.mxu0 0.0
  %272 = vmatpush.msra.mxu0 0.0
  %273 = vmatpush.msra.mxu0 0.0
  %274 = vmatpush.msra.mxu0 0.0
  %275 = vmatpush.msra.mxu0 0.0
  %276 = vmatpush.msra.mxu0 0.0
  %277 = vmatpush.msra.mxu0 0.0
  %278 = vmatpush.msra.mxu0 0.0
  %279 = vmatpush.msra.mxu0 0.0
  %280 = vmatpush.msra.mxu0 %v135
  %281 = vmatpush.msra.mxu0 %v134
  %282 = vmatmul.f32.gmra.mxu0 %v264
  %v283 = vpop.f32.mrf.mxu0
  %v284 = vadd.f32 0.0, %v283
  %285 = vdwg.mxu0
  %v286 = vadd.f32 %v117, %v284
  %v287 = vxor.u32 %v286, 2147483648
  %v288 = vmul.f32 %v287, 1.442695
  %v289 = vpow.pop %v288
  %v290 = vadd.f32 %v289, 1.0
  %v291 = vrcp.pop %v290
  %v292 = vmul.f32 %v290, %v291
  %v293 = vsub.f32 1.0, %v292
  %v294 = vmul.f32 %v291, %v293
  %v295 = vadd.f32 %v291, %v294
  %vm296 = vweird.f32 %v290
  %vm297 = vweird.f32 %v291
  %vm298 = vmor %vm296, %vm297
  %v299 = vsel %vm298, %v291, %v295
  %v300 = vand.u32 2147483647, %v290
  %vm301 = vcmp.eq.f32.partialorder %v300, 8.507059e+37
  %v302 = vand.u32 %v290, 2147483648
  %v303 = vor.u32 1.1754944e-38, %v302
  %v304 = vsel %vm301, %v303, %v299
  %v305 = vmul.f32 1.0, %v304
  %v306 = vtanh.pop %v286
  %v307 = vmul.f32 %v305, %v254
  %309 = vrot.lane.b32.xlu0 %v306, 80
  %v310 = vpop.permute.xlu0 %309
  %v312 = vmul.f32 %v305, %v310
  %314 = vrot.lane.b32.xlu0 %v312, 16
  %v315 = vpop.permute.xlu0 %314
  %v317 = vadd.f32 %v307, %v315
  %v318 = vtanh.pop %v317
  %320 = vrot.lane.b32.xlu0 %v318, 16
  %v321 = vpop.permute.xlu0 %320
  %v323 = vmul.f32 %v305, %v321
  %325 = vrot.lane.b32.xlu0 %v323, 96
  %v326 = vpop.permute.xlu0 %325
  %v327 = vsel %vm136, %v326, 0
  %329 = vmatpush.msra.mxu0 0.0
  %330 = vmatpush.msra.mxu0 0.0
  %331 = vmatpush.msra.mxu0 0.0
  %332 = vmatpush.msra.mxu0 0.0
  %333 = vmatpush.msra.mxu0 0.0
  %334 = vmatpush.msra.mxu0 0.0
  %335 = vmatpush.msra.mxu0 0.0
  %336 = vmatpush.msra.mxu0 0.0
  %337 = vmatpush.msra.mxu0 0.0
  %338 = vmatpush.msra.mxu0 0.0
  %339 = vmatpush.msra.mxu0 0.0
  %340 = vmatpush.msra.mxu0 0.0
  %341 = vmatpush.msra.mxu0 0.0
  %342 = vmatpush.msra.mxu0 0.0
  %343 = vmatpush.msra.mxu0 %v135
  %344 = vmatpush.msra.mxu0 %v134
  %345 = vmatmul.f32.gmra.mxu0 %v327
  %v346 = vpop.f32.mrf.mxu0
  %v347 = vadd.f32 0.0, %v346
  %348 = vdwg.mxu0
  %v349 = vadd.f32 %v120, %v347
  %v350 = vxor.u32 %v349, 2147483648
  %v351 = vmul.f32 %v350, 1.442695
  %v352 = vpow.pop %v351
  %v353 = vadd.f32 %v352, 1.0
  %v354 = vrcp.pop %v353
  %v355 = vmul.f32 %v353, %v354
  %v356 = vsub.f32 1.0, %v355
  %v357 = vmul.f32 %v354, %v356
  %v358 = vadd.f32 %v354, %v357
  %vm359 = vweird.f32 %v353
  %vm360 = vweird.f32 %v354
  %vm361 = vmor %vm359, %vm360
  %v362 = vsel %vm361, %v354, %v358
  %v363 = vand.u32 2147483647, %v353
  %vm364 = vcmp.eq.f32.partialorder %v363, 8.507059e+37
  %v365 = vand.u32 %v353, 2147483648
  %v366 = vor.u32 1.1754944e-38, %v365
  %v367 = vsel %vm364, %v366, %v362
  %v368 = vmul.f32 1.0, %v367
  %v369 = vtanh.pop %v349
  %v370 = vmul.f32 %v368, %v317
  %372 = vrot.lane.b32.xlu0 %v369, 80
  %v373 = vpop.permute.xlu0 %372
  %v375 = vmul.f32 %v368, %v373
  %377 = vrot.lane.b32.xlu0 %v375, 16
  %v378 = vpop.permute.xlu0 %377
  %v380 = vadd.f32 %v370, %v378
  %v381 = vtanh.pop %v380
  %383 = vrot.lane.b32.xlu0 %v381, 16
  %v384 = vpop.permute.xlu0 %383
  %v386 = vmul.f32 %v368, %v384
  %388 = vrot.lane.b32.xlu0 %v386, 96
  %v389 = vpop.permute.xlu0 %388
  %v390 = vsel %vm136, %v389, 0
  %392 = vmatpush.msra.mxu0 0.0
  %393 = vmatpush.msra.mxu0 0.0
  %394 = vmatpush.msra.mxu0 0.0
  %395 = vmatpush.msra.mxu0 0.0
  %396 = vmatpush.msra.mxu0 0.0
  %397 = vmatpush.msra.mxu0 0.0
  %398 = vmatpush.msra.mxu0 0.0
  %399 = vmatpush.msra.mxu0 0.0
  %400 = vmatpush.msra.mxu0 0.0
  %401 = vmatpush.msra.mxu0 0.0
  %402 = vmatpush.msra.mxu0 0.0
  %403 = vmatpush.msra.mxu0 0.0
  %404 = vmatpush.msra.mxu0 0.0
  %405 = vmatpush.msra.mxu0 0.0
  %406 = vmatpush.msra.mxu0 %v135
  %407 = vmatpush.msra.mxu0 %v134
  %408 = vmatmul.f32.gmra.mxu0 %v390
  %v409 = vpop.f32.mrf.mxu0
  %v410 = vadd.f32 0.0, %v409
  %411 = vdwg.mxu0
  %v412 = vadd.f32 %v123, %v410
  %v413 = vxor.u32 %v412, 2147483648
  %v414 = vmul.f32 %v413, 1.442695
  %v415 = vpow.pop %v414
  %v416 = vadd.f32 %v415, 1.0
  %v417 = vrcp.pop %v416
  %v418 = vmul.f32 %v416, %v417
  %v419 = vsub.f32 1.0, %v418
  %v420 = vmul.f32 %v417, %v419
  %v421 = vadd.f32 %v417, %v420
  %vm422 = vweird.f32 %v416
  %vm423 = vweird.f32 %v417
  %vm424 = vmor %vm422, %vm423
  %v425 = vsel %vm424, %v417, %v421
  %v426 = vand.u32 2147483647, %v416
  %vm427 = vcmp.eq.f32.partialorder %v426, 8.507059e+37
  %v428 = vand.u32 %v416, 2147483648
  %v429 = vor.u32 1.1754944e-38, %v428
  %v430 = vsel %vm427, %v429, %v425
  %v431 = vmul.f32 1.0, %v430
  %v432 = vtanh.pop %v412
  %v433 = vmul.f32 %v431, %v380
  %435 = vrot.lane.b32.xlu0 %v432, 80
  %v436 = vpop.permute.xlu0 %435
  %v438 = vmul.f32 %v431, %v436
  %440 = vrot.lane.b32.xlu0 %v438, 16
  %v441 = vpop.permute.xlu0 %440
  %v443 = vadd.f32 %v433, %v441
  %v444 = vtanh.pop %v443
  %446 = vrot.lane.b32.xlu0 %v444, 16
  %v447 = vpop.permute.xlu0 %446
  %v449 = vmul.f32 %v431, %v447
  %451 = vrot.lane.b32.xlu0 %v449, 96
  %v452 = vpop.permute.xlu0 %451
  %v453 = vsel %vm136, %v452, 0
  %455 = vmatpush.msra.mxu0 0.0
  %456 = vmatpush.msra.mxu0 0.0
  %457 = vmatpush.msra.mxu0 0.0
  %458 = vmatpush.msra.mxu0 0.0
  %459 = vmatpush.msra.mxu0 0.0
  %460 = vmatpush.msra.mxu0 0.0
  %461 = vmatpush.msra.mxu0 0.0
  %462 = vmatpush.msra.mxu0 0.0
  %463 = vmatpush.msra.mxu0 0.0
  %464 = vmatpush.msra.mxu0 0.0
  %465 = vmatpush.msra.mxu0 0.0
  %466 = vmatpush.msra.mxu0 0.0
  %467 = vmatpush.msra.mxu0 0.0
  %468 = vmatpush.msra.mxu0 0.0
  %469 = vmatpush.msra.mxu0 %v135
  %470 = vmatpush.msra.mxu0 %v134
  %471 = vmatmul.f32.gmra.mxu0 %v453
  %v472 = vpop.f32.mrf.mxu0
  %v473 = vadd.f32 0.0, %v472
  %474 = vdwg.mxu0
  %v475 = vadd.f32 %v126, %v473
  %v476 = vxor.u32 %v475, 2147483648
  %v477 = vmul.f32 %v476, 1.442695
  %v478 = vpow.pop %v477
  %v479 = vadd.f32 %v478, 1.0
  %v480 = vrcp.pop %v479
  %v481 = vmul.f32 %v479, %v480
  %v482 = vsub.f32 1.0, %v481
  %v483 = vmul.f32 %v480, %v482
  %v484 = vadd.f32 %v480, %v483
  %vm485 = vweird.f32 %v479
  %vm486 = vweird.f32 %v480
  %vm487 = vmor %vm485, %vm486
  %v488 = vsel %vm487, %v480, %v484
  %v489 = vand.u32 2147483647, %v479
  %vm490 = vcmp.eq.f32.partialorder %v489, 8.507059e+37
  %v491 = vand.u32 %v479, 2147483648
  %v492 = vor.u32 1.1754944e-38, %v491
  %v493 = vsel %vm490, %v492, %v488
  %v494 = vmul.f32 1.0, %v493
  %v495 = vtanh.pop %v475
  %v496 = vmul.f32 %v494, %v443
  %498 = vrot.lane.b32.xlu0 %v495, 80
  %v499 = vpop.permute.xlu0 %498
  %v501 = vmul.f32 %v494, %v499
  %503 = vrot.lane.b32.xlu0 %v501, 16
  %v504 = vpop.permute.xlu0 %503
  %v506 = vadd.f32 %v496, %v504
  %v507 = vtanh.pop %v506
  %509 = vrot.lane.b32.xlu0 %v507, 16
  %v510 = vpop.permute.xlu0 %509
  %v512 = vmul.f32 %v494, %v510
  %514 = vrot.lane.b32.xlu0 %v512, 96
  %v515 = vpop.permute.xlu0 %514
  %v516 = vsel %vm136, %v515, 0
  %518 = vmatpush.msra.mxu0 0.0
  %519 = vmatpush.msra.mxu0 0.0
  %520 = vmatpush.msra.mxu0 0.0
  %521 = vmatpush.msra.mxu0 0.0
  %522 = vmatpush.msra.mxu0 0.0
  %523 = vmatpush.msra.mxu0 0.0
  %524 = vmatpush.msra.mxu0 0.0
  %525 = vmatpush.msra.mxu0 0.0
  %526 = vmatpush.msra.mxu0 0.0
  %527 = vmatpush.msra.mxu0 0.0
  %528 = vmatpush.msra.mxu0 0.0
  %529 = vmatpush.msra.mxu0 0.0
  %530 = vmatpush.msra.mxu0 0.0
  %531 = vmatpush.msra.mxu0 0.0
  %532 = vmatpush.msra.mxu0 %v135
  %533 = vmatpush.msra.mxu0 %v134
  %534 = vmatmul.f32.gmra.mxu0 %v516
  %v535 = vpop.f32.mrf.mxu0
  %v536 = vadd.f32 0.0, %v535
  %537 = vdwg.mxu0
  %v538 = vadd.f32 %v129, %v536
  %v539 = vxor.u32 %v538, 2147483648
  %v540 = vmul.f32 %v539, 1.442695
  %v541 = vpow.pop %v540
  %v542 = vadd.f32 %v541, 1.0
  %v543 = vrcp.pop %v542
  %v544 = vmul.f32 %v542, %v543
  %v545 = vsub.f32 1.0, %v544
  %v546 = vmul.f32 %v543, %v545
  %v547 = vadd.f32 %v543, %v546
  %vm548 = vweird.f32 %v542
  %vm549 = vweird.f32 %v543
  %vm550 = vmor %vm548, %vm549
  %v551 = vsel %vm550, %v543, %v547
  %v552 = vand.u32 2147483647, %v542
  %vm553 = vcmp.eq.f32.partialorder %v552, 8.507059e+37
  %v554 = vand.u32 %v542, 2147483648
  %v555 = vor.u32 1.1754944e-38, %v554
  %v556 = vsel %vm553, %v555, %v551
  %v557 = vmul.f32 1.0, %v556
  %v558 = vtanh.pop %v538
  %v559 = vmul.f32 %v557, %v506
  %561 = vrot.lane.b32.xlu0 %v558, 80
  %v562 = vpop.permute.xlu0 %561
  %v564 = vmul.f32 %v557, %v562
  %566 = vrot.lane.b32.xlu0 %v564, 16
  %v567 = vpop.permute.xlu0 %566
  %v569 = vadd.f32 %v559, %v567
  %v570 = vtanh.pop %v569
  %572 = vrot.lane.b32.xlu0 %v570, 16
  %v573 = vpop.permute.xlu0 %572
  %v575 = vmul.f32 %v557, %v573
  %577 = vrot.lane.b32.xlu0 %v575, 96
  %v578 = vpop.permute.xlu0 %577
  %v579 = vsel %vm136, %v578, 0
  %581 = vmatpush.msra.mxu0 0.0
  %582 = vmatpush.msra.mxu0 0.0
  %583 = vmatpush.msra.mxu0 0.0
  %584 = vmatpush.msra.mxu0 0.0
  %585 = vmatpush.msra.mxu0 0.0
  %586 = vmatpush.msra.mxu0 0.0
  %587 = vmatpush.msra.mxu0 0.0
  %588 = vmatpush.msra.mxu0 0.0
  %589 = vmatpush.msra.mxu0 0.0
  %590 = vmatpush.msra.mxu0 0.0
  %591 = vmatpush.msra.mxu0 0.0
  %592 = vmatpush.msra.mxu0 0.0
  %593 = vmatpush.msra.mxu0 0.0
  %594 = vmatpush.msra.mxu0 0.0
  %595 = vmatpush.msra.mxu0 %v135
  %596 = vmatpush.msra.mxu0 %v134
  %597 = vmatmul.f32.gmra.mxu0 %v579
  %v598 = vpop.f32.mrf.mxu0
  %v599 = vadd.f32 0.0, %v598
  %600 = vdwg.mxu0
  %v601 = vadd.f32 %v132, %v599
  %v602 = vxor.u32 %v601, 2147483648
  %v603 = vmul.f32 %v602, 1.442695
  %v604 = vpow.pop %v603
  %v605 = vadd.f32 %v604, 1.0
  %v606 = vrcp.pop %v605
  %v607 = vmul.f32 %v605, %v606
  %v608 = vsub.f32 1.0, %v607
  %v609 = vmul.f32 %v606, %v608
  %v610 = vadd.f32 %v606, %v609
  %vm611 = vweird.f32 %v605
  %vm612 = vweird.f32 %v606
  %vm613 = vmor %vm611, %vm612
  %v614 = vsel %vm613, %v606, %v610
  %v615 = vand.u32 2147483647, %v605
  %vm616 = vcmp.eq.f32.partialorder %v615, 8.507059e+37
  %v617 = vand.u32 %v605, 2147483648
  %v618 = vor.u32 1.1754944e-38, %v617
  %v619 = vsel %vm616, %v618, %v614
  %v620 = vmul.f32 1.0, %v619
  %v621 = vtanh.pop %v601
  %v622 = vmul.f32 %v620, %v569
  %624 = vrot.lane.b32.xlu0 %v621, 80
  %v625 = vpop.permute.xlu0 %624
  %v627 = vmul.f32 %v620, %v625
  %629 = vrot.lane.b32.xlu0 %v627, 16
  %v630 = vpop.permute.xlu0 %629
  %v632 = vadd.f32 %v622, %v630
  %v633 = vtanh.pop %v632
  %635 = vrot.lane.b32.xlu0 %v633, 16
  %v636 = vpop.permute.xlu0 %635
  %v638 = vmul.f32 %v620, %v636
  %v639 = vld [vmem:[%s4] sm:$0xff]
  %v640 = vld [vmem:[%s4 + $0x8] sm:$0xff]
  %v641 = vld [vmem:[%s5] sm:$0x1]
  %v643 = vperm.slane %v641, 0
  %646 = vrot.lane.b32.xlu0 %v638, 96
  %v647 = vpop.permute.xlu0 %646
  %v648 = vsel %vm136, %v647, 0
  %650 = vmatpush.msra.mxu0 0.0
  %651 = vmatpush.msra.mxu0 0.0
  %652 = vmatpush.msra.mxu0 0.0
  %653 = vmatpush.msra.mxu0 0.0
  %654 = vmatpush.msra.mxu0 0.0
  %655 = vmatpush.msra.mxu0 0.0
  %656 = vmatpush.msra.mxu0 0.0
  %657 = vmatpush.msra.mxu0 0.0
  %658 = vmatpush.msra.mxu0 0.0
  %659 = vmatpush.msra.mxu0 0.0
  %660 = vmatpush.msra.mxu0 0.0
  %661 = vmatpush.msra.mxu0 0.0
  %662 = vmatpush.msra.mxu0 0.0
  %663 = vmatpush.msra.mxu0 0.0
  %664 = vmatpush.msra.mxu0 %v640
  %665 = vmatpush.msra.mxu0 %v639
  %666 = vmatmul.f32.gmra.mxu0 %v648
  %v667 = vpop.f32.mrf.mxu0
  %v668 = vadd.f32 %v643, %v667
  %669 = vdwg.mxu0
  %v670 = vsel %vm136, 0.0, %v632
  %v671 = vld [vmem:[%s9] sm:$0xff]
  %v672 = vld [vmem:[%s9 + $0x8] sm:$0xff]
  %v673 = vld [vmem:[%s9 + $0x10] sm:$0xff]
  %v674 = vld [vmem:[%s9 + $0x18] sm:$0xff]
  %v675 = vld [vmem:[%s10] sm:$0x1]
  %v676 = vld [vmem:[%s11] sm:$0x1]
  %v677 = vld [vmem:[%s12] sm:$0xff]
  %v678 = vld [vmem:[%s12 + $0x8] sm:$0xff]
  %v679 = vld [vmem:[%s12 + $0x10] sm:$0xff]
  %v680 = vld [vmem:[%s12 + $0x18] sm:$0xff]
  %v681 = vld [vmem:[%s13] sm:$0x1]
  %v682 = vld [vmem:[%s6] sm:$0xff]
  %v683 = vld [vmem:[%s6 + $0x8] sm:$0xff]
  %v684 = vld [vmem:[%s6 + $0x10] sm:$0xff]
  %v685 = vld [vmem:[%s6 + $0x18] sm:$0xff]
  %v686 = vld [vmem:[%s6 + $0x20] sm:$0x3]
  %v687 = vld [vmem:[%s7] sm:$0xff]
  %v688 = vld [vmem:[%s7 + $0x8] sm:$0xff]
  %v689 = vld [vmem:[%s7 + $0x10] sm:$0xff]
  %v690 = vld [vmem:[%s7 + $0x18] sm:$0xff]
  %vm691 = vcmask 261120
  %v693 = vsel %vm691, %v668, 0
  %695 = vmatpush.msra.mxu0 0.0
  %696 = vmatpush.msra.mxu0 0.0
  %697 = vmatpush.msra.mxu0 0.0
  %698 = vmatpush.msra.mxu0 0.0
  %699 = vmatpush.msra.mxu0 0.0
  %700 = vmatpush.msra.mxu0 0.0
  %701 = vmatpush.msra.mxu0 0.0
  %702 = vmatpush.msra.mxu0 0.0
  %703 = vmatpush.msra.mxu0 0.0
  %704 = vmatpush.msra.mxu0 0.0
  %705 = vmatpush.msra.mxu0 0.0
  %706 = vmatpush.msra.mxu0 0.0
  %707 = vmatpush.msra.mxu0 %v690
  %708 = vmatpush.msra.mxu0 %v689
  %709 = vmatpush.msra.mxu0 %v688
  %710 = vmatpush.msra.mxu0 %v687
  %711 = vmatmul.f32.gmra.mxu0 %v693
  %v712 = vpop.f32.mrf.mxu0
  %v713 = vadd.f32 0.0, %v712
  %714 = vdwg.mxu0
  %v716 = vsel %vm89, %v686, 0
  %718 = vmatpush.msra.mxu0 0.0
  %719 = vmatpush.msra.mxu0 0.0
  %720 = vmatpush.msra.mxu0 0.0
  %721 = vmatpush.msra.mxu0 0.0
  %722 = vmatpush.msra.mxu0 0.0
  %723 = vmatpush.msra.mxu0 0.0
  %724 = vmatpush.msra.mxu0 0.0
  %725 = vmatpush.msra.mxu0 0.0
  %726 = vmatpush.msra.mxu0 0.0
  %727 = vmatpush.msra.mxu0 0.0
  %728 = vmatpush.msra.mxu0 0.0
  %729 = vmatpush.msra.mxu0 %v716
  %730 = vmatpush.msra.mxu0 %v685
  %731 = vmatpush.msra.mxu0 %v684
  %732 = vmatpush.msra.mxu0 %v683
  %733 = vmatpush.msra.mxu0 %v682
  %734 = vmatmul.f32.gmra.mxu0 %v87
  %v735 = vpop.f32.mrf.mxu0
  %v736 = vadd.f32 %v713, %v735
  %737 = vdwg.mxu0
  %v738 = vld [vmem:[%s8] sm:$0x1]
  %v740 = vperm.slane %v738, 0
  %v742 = vadd.f32 %v736, %v740
  %v743 = vxor.u32 %v742, 2147483648
  %v744 = vmul.f32 %v743, 1.442695
  %v745 = vpow.pop %v744
  %v746 = vadd.f32 %v745, 1.0
  %v747 = vrcp.pop %v746
  %v748 = vmul.f32 %v746, %v747
  %v749 = vsub.f32 1.0, %v748
  %v750 = vmul.f32 %v747, %v749
  %v751 = vadd.f32 %v747, %v750
  %vm752 = vweird.f32 %v746
  %vm753 = vweird.f32 %v747
  %vm754 = vmor %vm752, %vm753
  %v755 = vsel %vm754, %v747, %v751
  %v756 = vand.u32 2147483647, %v746
  %vm757 = vcmp.eq.f32.partialorder %v756, 8.507059e+37
  %v758 = vand.u32 %v746, 2147483648
  %v759 = vor.u32 1.1754944e-38, %v758
  %v760 = vsel %vm757, %v759, %v755
  %v761 = vmul.f32 1.0, %v760
  %v762 = vtanh.pop %v742
  %764 = vrot.lane.b32.xlu0 %v670, 32
  %v765 = vpop.permute.xlu0 %764
  %v767 = vmul.f32 %v761, %v765
  %769 = vrot.lane.b32.xlu0 %v762, 32
  %v770 = vpop.permute.xlu0 %769
  %v772 = vmul.f32 %v761, %v770
  %774 = vrot.lane.b32.xlu0 %v772, 32
  %v775 = vpop.permute.xlu0 %774
  %v777 = vadd.f32 %v767, %v775
  %v778 = vtanh.pop %v777
  %780 = vrot.lane.b32.xlu0 %v778, 32
  %v781 = vpop.permute.xlu0 %780
  %v783 = vmul.f32 %v761, %v781
  %v785 = vperm.slane %v681, 0
  %788 = vrot.lane.b32.xlu0 %v783, 64
  %v789 = vpop.permute.xlu0 %788
  %v790 = vsel %vm691, %v789, 0
  %792 = vmatpush.msra.mxu0 0.0
  %793 = vmatpush.msra.mxu0 0.0
  %794 = vmatpush.msra.mxu0 0.0
  %795 = vmatpush.msra.mxu0 0.0
  %796 = vmatpush.msra.mxu0 0.0
  %797 = vmatpush.msra.mxu0 0.0
  %798 = vmatpush.msra.mxu0 0.0
  %799 = vmatpush.msra.mxu0 0.0
  %800 = vmatpush.msra.mxu0 0.0
  %801 = vmatpush.msra.mxu0 0.0
  %802 = vmatpush.msra.mxu0 0.0
  %803 = vmatpush.msra.mxu0 0.0
  %804 = vmatpush.msra.mxu0 %v680
  %805 = vmatpush.msra.mxu0 %v679
  %806 = vmatpush.msra.mxu0 %v678
  %807 = vmatpush.msra.mxu0 %v677
  %808 = vmatmul.f32.gmra.mxu0 %v790
  %v809 = vpop.f32.mrf.mxu0
  %v810 = vadd.f32 %v785, %v809
  %811 = vdwg.mxu0
  %v812 = vxor.u32 %v810, 2147483648
  %v813 = vmul.f32 %v812, 1.442695
  %v814 = vpow.pop %v813
  %v815 = vadd.f32 %v814, 1.0
  %v816 = vrcp.pop %v815
  %v817 = vmul.f32 %v815, %v816
  %v818 = vsub.f32 1.0, %v817
  %v819 = vmul.f32 %v816, %v818
  %v820 = vadd.f32 %v816, %v819
  %vm821 = vweird.f32 %v815
  %vm822 = vweird.f32 %v816
  %vm823 = vmor %vm821, %vm822
  %v824 = vsel %vm823, %v816, %v820
  %v825 = vand.u32 2147483647, %v815
  %vm826 = vcmp.eq.f32.partialorder %v825, 8.507059e+37
  %v827 = vand.u32 %v815, 2147483648
  %v828 = vor.u32 1.1754944e-38, %v827
  %v829 = vsel %vm826, %v828, %v824
  %v830 = vmul.f32 1.0, %v829
  %v831 = vsub.f32 1.0, %v830
  %833 = vrot.lane.b32.xlu0 %v831, 1
  %v834 = vpop.permute.xlu0 %833
  %v836 = vsel %vm64, %v810, %v830
  %vm837 = vcmask 285696
  %v838 = vsel %vm837, %v836, %v834
  %vm839 = vcmask 293888
  %v840 = vsel %vm839, %v838, 0.0
  %841 = vst [vmem:[%s14] sm:$0xff] %v840
  %843 = vset.pattern.permute.xlu0 34
  %844 = vperm.xlu0 %843, %v830
  %v845 = vpop.permute.xlu0 %844
  %v848 = vperm.slane %v675, 0
  %v850 = vmul.f32 %v845, %v848
  %851 = vmatpush.msra.mxu0 0.0
  %852 = vmatpush.msra.mxu0 0.0
  %853 = vmatpush.msra.mxu0 0.0
  %854 = vmatpush.msra.mxu0 0.0
  %855 = vmatpush.msra.mxu0 0.0
  %856 = vmatpush.msra.mxu0 0.0
  %857 = vmatpush.msra.mxu0 0.0
  %858 = vmatpush.msra.mxu0 0.0
  %859 = vmatpush.msra.mxu0 0.0
  %860 = vmatpush.msra.mxu0 0.0
  %861 = vmatpush.msra.mxu0 0.0
  %862 = vmatpush.msra.mxu0 0.0
  %863 = vmatpush.msra.mxu0 %v674
  %864 = vmatpush.msra.mxu0 %v673
  %865 = vmatpush.msra.mxu0 %v672
  %866 = vmatpush.msra.mxu0 %v671
  %867 = vmatmul.f32.gmra.mxu0 %v790
  %v868 = vpop.f32.mrf.mxu0
  %v869 = vadd.f32 %v850, %v868
  %870 = vdwg.mxu0
  %v872 = vperm.slane %v676, 0
  %v874 = vadd.f32 %v869, %v872
  %v875 = vxor.u32 %v874, 2147483648
  %v876 = vmul.f32 %v875, 1.442695
  %v877 = vpow.pop %v876
  %v878 = vadd.f32 %v877, 1.0
  %v879 = vrcp.pop %v878
  %v880 = vmul.f32 %v878, %v879
  %v881 = vsub.f32 1.0, %v880
  %v882 = vmul.f32 %v879, %v881
  %v883 = vadd.f32 %v879, %v882
  %vm884 = vweird.f32 %v878
  %vm885 = vweird.f32 %v879
  %vm886 = vmor %vm884, %vm885
  %v887 = vsel %vm886, %v879, %v883
  %v888 = vand.u32 2147483647, %v878
  %vm889 = vcmp.eq.f32.partialorder %v888, 8.507059e+37
  %v890 = vand.u32 %v878, 2147483648
  %v891 = vor.u32 1.1754944e-38, %v890
  %v892 = vsel %vm889, %v891, %v887
  %v893 = vmul.f32 1.0, %v892
  %v894 = vtanh.pop %v874
  %v895 = vmul.f32 %v893, %v777
  %897 = vrot.lane.b32.xlu0 %v894, 32
  %v898 = vpop.permute.xlu0 %897
  %v900 = vmul.f32 %v893, %v898
  %902 = vrot.lane.b32.xlu0 %v900, 32
  %v903 = vpop.permute.xlu0 %902
  %v905 = vadd.f32 %v895, %v903
  %v906 = vtanh.pop %v905
  %908 = vrot.lane.b32.xlu0 %v906, 32
  %v909 = vpop.permute.xlu0 %908
  %v911 = vmul.f32 %v893, %v909
  %913 = vrot.lane.b32.xlu0 %v911, 64
  %v914 = vpop.permute.xlu0 %913
  %v915 = vsel %vm691, %v914, 0
  %917 = vmatpush.msra.mxu0 0.0
  %918 = vmatpush.msra.mxu0 0.0
  %919 = vmatpush.msra.mxu0 0.0
  %920 = vmatpush.msra.mxu0 0.0
  %921 = vmatpush.msra.mxu0 0.0
  %922 = vmatpush.msra.mxu0 0.0
  %923 = vmatpush.msra.mxu0 0.0
  %924 = vmatpush.msra.mxu0 0.0
  %925 = vmatpush.msra.mxu0 0.0
  %926 = vmatpush.msra.mxu0 0.0
  %927 = vmatpush.msra.mxu0 0.0
  %928 = vmatpush.msra.mxu0 0.0
  %929 = vmatpush.msra.mxu0 %v680
  %930 = vmatpush.msra.mxu0 %v679
  %931 = vmatpush.msra.mxu0 %v678
  %932 = vmatpush.msra.mxu0 %v677
  %933 = vmatmul.f32.gmra.mxu0 %v915
  %v934 = vpop.f32.mrf.mxu0
  %v935 = vadd.f32 %v785, %v934
  %936 = vdwg.mxu0
  %v937 = vxor.u32 %v935, 2147483648
  %v938 = vmul.f32 %v937, 1.442695
  %v939 = vpow.pop %v938
  %v940 = vadd.f32 %v939, 1.0
  %v941 = vrcp.pop %v940
  %v942 = vmul.f32 %v940, %v941
  %v943 = vsub.f32 1.0, %v942
  %v944 = vmul.f32 %v941, %v943
  %v945 = vadd.f32 %v941, %v944
  %vm946 = vweird.f32 %v940
  %vm947 = vweird.f32 %v941
  %vm948 = vmor %vm946, %vm947
  %v949 = vsel %vm948, %v941, %v945
  %v950 = vand.u32 2147483647, %v940
  %vm951 = vcmp.eq.f32.partialorder %v950, 8.507059e+37
  %v952 = vand.u32 %v940, 2147483648
  %v953 = vor.u32 1.1754944e-38, %v952
  %v954 = vsel %vm951, %v953, %v949
  %v955 = vmul.f32 1.0, %v954
  %v956 = vsub.f32 1.0, %v955
  %958 = vrot.lane.b32.xlu0 %v956, 1
  %v959 = vpop.permute.xlu0 %958
  %v961 = vsel %vm64, %v935, %v955
  %v962 = vsel %vm837, %v961, %v959
  %v963 = vsel %vm839, %v962, 0.0
  %s964 = scalar_lea.vmem %s14, 8
  %965 = vst [vmem:[%s964] sm:$0xff] %v963
  %967 = vset.pattern.permute.xlu0 34
  %968 = vperm.xlu0 %967, %v955
  %v969 = vpop.permute.xlu0 %968
  %v971 = vmul.f32 %v969, %v848
  %972 = vmatpush.msra.mxu0 0.0
  %973 = vmatpush.msra.mxu0 0.0
  %974 = vmatpush.msra.mxu0 0.0
  %975 = vmatpush.msra.mxu0 0.0
  %976 = vmatpush.msra.mxu0 0.0
  %977 = vmatpush.msra.mxu0 0.0
  %978 = vmatpush.msra.mxu0 0.0
  %979 = vmatpush.msra.mxu0 0.0
  %980 = vmatpush.msra.mxu0 0.0
  %981 = vmatpush.msra.mxu0 0.0
  %982 = vmatpush.msra.mxu0 0.0
  %983 = vmatpush.msra.mxu0 0.0
  %984 = vmatpush.msra.mxu0 %v674
  %985 = vmatpush.msra.mxu0 %v673
  %986 = vmatpush.msra.mxu0 %v672
  %987 = vmatpush.msra.mxu0 %v671
  %988 = vmatmul.f32.gmra.mxu0 %v915
  %v989 = vpop.f32.mrf.mxu0
  %v990 = vadd.f32 %v971, %v989
  %991 = vdwg.mxu0
  %v992 = vadd.f32 %v990, %v872
  %v993 = vxor.u32 %v992, 2147483648
  %v994 = vmul.f32 %v993, 1.442695
  %v995 = vpow.pop %v994
  %v996 = vadd.f32 %v995, 1.0
  %v997 = vrcp.pop %v996
  %v998 = vmul.f32 %v996, %v997
  %v999 = vsub.f32 1.0, %v998
  %v1000 = vmul.f32 %v997, %v999
  %v1001 = vadd.f32 %v997, %v1000
  %vm1002 = vweird.f32 %v996
  %vm1003 = vweird.f32 %v997
  %vm1004 = vmor %vm1002, %vm1003
  %v1005 = vsel %vm1004, %v997, %v1001
  %v1006 = vand.u32 2147483647, %v996
  %vm1007 = vcmp.eq.f32.partialorder %v1006, 8.507059e+37
  %v1008 = vand.u32 %v996, 2147483648
  %v1009 = vor.u32 1.1754944e-38, %v1008
  %v1010 = vsel %vm1007, %v1009, %v1005
  %v1011 = vmul.f32 1.0, %v1010
  %v1012 = vtanh.pop %v992
  %v1013 = vmul.f32 %v1011, %v905
  %1015 = vrot.lane.b32.xlu0 %v1012, 32
  %v1016 = vpop.permute.xlu0 %1015
  %v1018 = vmul.f32 %v1011, %v1016
  %1020 = vrot.lane.b32.xlu0 %v1018, 32
  %v1021 = vpop.permute.xlu0 %1020
  %v1023 = vadd.f32 %v1013, %v1021
  %v1024 = vtanh.pop %v1023
  %1026 = vrot.lane.b32.xlu0 %v1024, 32
  %v1027 = vpop.permute.xlu0 %1026
  %v1029 = vmul.f32 %v1011, %v1027
  %1031 = vrot.lane.b32.xlu0 %v1029, 64
  %v1032 = vpop.permute.xlu0 %1031
  %v1033 = vsel %vm691, %v1032, 0
  %1035 = vmatpush.msra.mxu0 0.0
  %1036 = vmatpush.msra.mxu0 0.0
  %1037 = vmatpush.msra.mxu0 0.0
  %1038 = vmatpush.msra.mxu0 0.0
  %1039 = vmatpush.msra.mxu0 0.0
  %1040 = vmatpush.msra.mxu0 0.0
  %1041 = vmatpush.msra.mxu0 0.0
  %1042 = vmatpush.msra.mxu0 0.0
  %1043 = vmatpush.msra.mxu0 0.0
  %1044 = vmatpush.msra.mxu0 0.0
  %1045 = vmatpush.msra.mxu0 0.0
  %1046 = vmatpush.msra.mxu0 0.0
  %1047 = vmatpush.msra.mxu0 %v680
  %1048 = vmatpush.msra.mxu0 %v679
  %1049 = vmatpush.msra.mxu0 %v678
  %1050 = vmatpush.msra.mxu0 %v677
  %1051 = vmatmul.f32.gmra.mxu0 %v1033
  %v1052 = vpop.f32.mrf.mxu0
  %v1053 = vadd.f32 %v785, %v1052
  %1054 = vdwg.mxu0
  %v1055 = vxor.u32 %v1053, 2147483648
  %v1056 = vmul.f32 %v1055, 1.442695
  %v1057 = vpow.pop %v1056
  %v1058 = vadd.f32 %v1057, 1.0
  %v1059 = vrcp.pop %v1058
  %v1060 = vmul.f32 %v1058, %v1059
  %v1061 = vsub.f32 1.0, %v1060
  %v1062 = vmul.f32 %v1059, %v1061
  %v1063 = vadd.f32 %v1059, %v1062
  %vm1064 = vweird.f32 %v1058
  %vm1065 = vweird.f32 %v1059
  %vm1066 = vmor %vm1064, %vm1065
  %v1067 = vsel %vm1066, %v1059, %v1063
  %v1068 = vand.u32 2147483647, %v1058
  %vm1069 = vcmp.eq.f32.partialorder %v1068, 8.507059e+37
  %v1070 = vand.u32 %v1058, 2147483648
  %v1071 = vor.u32 1.1754944e-38, %v1070
  %v1072 = vsel %vm1069, %v1071, %v1067
  %v1073 = vmul.f32 1.0, %v1072
  %v1074 = vsub.f32 1.0, %v1073
  %1076 = vrot.lane.b32.xlu0 %v1074, 1
  %v1077 = vpop.permute.xlu0 %1076
  %v1079 = vsel %vm64, %v1053, %v1073
  %v1080 = vsel %vm837, %v1079, %v1077
  %v1081 = vsel %vm839, %v1080, 0.0
  %s1082 = scalar_lea.vmem %s14, 16
  %1083 = vst [vmem:[%s1082] sm:$0xff] %v1081
  %1085 = vset.pattern.permute.xlu0 34
  %1086 = vperm.xlu0 %1085, %v1073
  %v1087 = vpop.permute.xlu0 %1086
  %v1089 = vmul.f32 %v1087, %v848
  %1090 = vmatpush.msra.mxu0 0.0
  %1091 = vmatpush.msra.mxu0 0.0
  %1092 = vmatpush.msra.mxu0 0.0
  %1093 = vmatpush.msra.mxu0 0.0
  %1094 = vmatpush.msra.mxu0 0.0
  %1095 = vmatpush.msra.mxu0 0.0
  %1096 = vmatpush.msra.mxu0 0.0
  %1097 = vmatpush.msra.mxu0 0.0
  %1098 = vmatpush.msra.mxu0 0.0
  %1099 = vmatpush.msra.mxu0 0.0
  %1100 = vmatpush.msra.mxu0 0.0
  %1101 = vmatpush.msra.mxu0 0.0
  %1102 = vmatpush.msra.mxu0 %v674
  %1103 = vmatpush.msra.mxu0 %v673
  %1104 = vmatpush.msra.mxu0 %v672
  %1105 = vmatpush.msra.mxu0 %v671
  %1106 = vmatmul.f32.gmra.mxu0 %v1033
  %v1107 = vpop.f32.mrf.mxu0
  %v1108 = vadd.f32 %v1089, %v1107
  %1109 = vdwg.mxu0
  %v1110 = vadd.f32 %v1108, %v872
  %v1111 = vxor.u32 %v1110, 2147483648
  %v1112 = vmul.f32 %v1111, 1.442695
  %v1113 = vpow.pop %v1112
  %v1114 = vadd.f32 %v1113, 1.0
  %v1115 = vrcp.pop %v1114
  %v1116 = vmul.f32 %v1114, %v1115
  %v1117 = vsub.f32 1.0, %v1116
  %v1118 = vmul.f32 %v1115, %v1117
  %v1119 = vadd.f32 %v1115, %v1118
  %vm1120 = vweird.f32 %v1114
  %vm1121 = vweird.f32 %v1115
  %vm1122 = vmor %vm1120, %vm1121
  %v1123 = vsel %vm1122, %v1115, %v1119
  %v1124 = vand.u32 2147483647, %v1114
  %vm1125 = vcmp.eq.f32.partialorder %v1124, 8.507059e+37
  %v1126 = vand.u32 %v1114, 2147483648
  %v1127 = vor.u32 1.1754944e-38, %v1126
  %v1128 = vsel %vm1125, %v1127, %v1123
  %v1129 = vmul.f32 1.0, %v1128
  %v1130 = vtanh.pop %v1110
  %v1131 = vmul.f32 %v1129, %v1023
  %1133 = vrot.lane.b32.xlu0 %v1130, 32
  %v1134 = vpop.permute.xlu0 %1133
  %v1136 = vmul.f32 %v1129, %v1134
  %1138 = vrot.lane.b32.xlu0 %v1136, 32
  %v1139 = vpop.permute.xlu0 %1138
  %v1141 = vadd.f32 %v1131, %v1139
  %v1142 = vtanh.pop %v1141
  %1144 = vrot.lane.b32.xlu0 %v1142, 32
  %v1145 = vpop.permute.xlu0 %1144
  %v1147 = vmul.f32 %v1129, %v1145
  %1149 = vrot.lane.b32.xlu0 %v1147, 64
  %v1150 = vpop.permute.xlu0 %1149
  %v1151 = vsel %vm691, %v1150, 0
  %1153 = vmatpush.msra.mxu0 0.0
  %1154 = vmatpush.msra.mxu0 0.0
  %1155 = vmatpush.msra.mxu0 0.0
  %1156 = vmatpush.msra.mxu0 0.0
  %1157 = vmatpush.msra.mxu0 0.0
  %1158 = vmatpush.msra.mxu0 0.0
  %1159 = vmatpush.msra.mxu0 0.0
  %1160 = vmatpush.msra.mxu0 0.0
  %1161 = vmatpush.msra.mxu0 0.0
  %1162 = vmatpush.msra.mxu0 0.0
  %1163 = vmatpush.msra.mxu0 0.0
  %1164 = vmatpush.msra.mxu0 0.0
  %1165 = vmatpush.msra.mxu0 %v680
  %1166 = vmatpush.msra.mxu0 %v679
  %1167 = vmatpush.msra.mxu0 %v678
  %1168 = vmatpush.msra.mxu0 %v677
  %1169 = vmatmul.f32.gmra.mxu0 %v1151
  %v1170 = vpop.f32.mrf.mxu0
  %v1171 = vadd.f32 %v785, %v1170
  %1172 = vdwg.mxu0
  %v1173 = vxor.u32 %v1171, 2147483648
  %v1174 = vmul.f32 %v1173, 1.442695
  %v1175 = vpow.pop %v1174
  %v1176 = vadd.f32 %v1175, 1.0
  %v1177 = vrcp.pop %v1176
  %v1178 = vmul.f32 %v1176, %v1177
  %v1179 = vsub.f32 1.0, %v1178
  %v1180 = vmul.f32 %v1177, %v1179
  %v1181 = vadd.f32 %v1177, %v1180
  %vm1182 = vweird.f32 %v1176
  %vm1183 = vweird.f32 %v1177
  %vm1184 = vmor %vm1182, %vm1183
  %v1185 = vsel %vm1184, %v1177, %v1181
  %v1186 = vand.u32 2147483647, %v1176
  %vm1187 = vcmp.eq.f32.partialorder %v1186, 8.507059e+37
  %v1188 = vand.u32 %v1176, 2147483648
  %v1189 = vor.u32 1.1754944e-38, %v1188
  %v1190 = vsel %vm1187, %v1189, %v1185
  %v1191 = vmul.f32 1.0, %v1190
  %v1192 = vsub.f32 1.0, %v1191
  %1194 = vrot.lane.b32.xlu0 %v1192, 1
  %v1195 = vpop.permute.xlu0 %1194
  %v1197 = vsel %vm64, %v1171, %v1191
  %v1198 = vsel %vm837, %v1197, %v1195
  %v1199 = vsel %vm839, %v1198, 0.0
  %s1200 = scalar_lea.vmem %s14, 24
  %1201 = vst [vmem:[%s1200] sm:$0xff] %v1199
  %1203 = vset.pattern.permute.xlu0 34
  %1204 = vperm.xlu0 %1203, %v1191
  %v1205 = vpop.permute.xlu0 %1204
  %v1207 = vmul.f32 %v1205, %v848
  %1208 = vmatpush.msra.mxu0 0.0
  %1209 = vmatpush.msra.mxu0 0.0
  %1210 = vmatpush.msra.mxu0 0.0
  %1211 = vmatpush.msra.mxu0 0.0
  %1212 = vmatpush.msra.mxu0 0.0
  %1213 = vmatpush.msra.mxu0 0.0
  %1214 = vmatpush.msra.mxu0 0.0
  %1215 = vmatpush.msra.mxu0 0.0
  %1216 = vmatpush.msra.mxu0 0.0
  %1217 = vmatpush.msra.mxu0 0.0
  %1218 = vmatpush.msra.mxu0 0.0
  %1219 = vmatpush.msra.mxu0 0.0
  %1220 = vmatpush.msra.mxu0 %v674
  %1221 = vmatpush.msra.mxu0 %v673
  %1222 = vmatpush.msra.mxu0 %v672
  %1223 = vmatpush.msra.mxu0 %v671
  %1224 = vmatmul.f32.gmra.mxu0 %v1151
  %v1225 = vpop.f32.mrf.mxu0
  %v1226 = vadd.f32 %v1207, %v1225
  %1227 = vdwg.mxu0
  %v1228 = vadd.f32 %v1226, %v872
  %v1229 = vxor.u32 %v1228, 2147483648
  %v1230 = vmul.f32 %v1229, 1.442695
  %v1231 = vpow.pop %v1230
  %v1232 = vadd.f32 %v1231, 1.0
  %v1233 = vrcp.pop %v1232
  %v1234 = vmul.f32 %v1232, %v1233
  %v1235 = vsub.f32 1.0, %v1234
  %v1236 = vmul.f32 %v1233, %v1235
  %v1237 = vadd.f32 %v1233, %v1236
  %vm1238 = vweird.f32 %v1232
  %vm1239 = vweird.f32 %v1233
  %vm1240 = vmor %vm1238, %vm1239
  %v1241 = vsel %vm1240, %v1233, %v1237
  %v1242 = vand.u32 2147483647, %v1232
  %vm1243 = vcmp.eq.f32.partialorder %v1242, 8.507059e+37
  %v1244 = vand.u32 %v1232, 2147483648
  %v1245 = vor.u32 1.1754944e-38, %v1244
  %v1246 = vsel %vm1243, %v1245, %v1241
  %v1247 = vmul.f32 1.0, %v1246
  %v1248 = vtanh.pop %v1228
  %v1249 = vmul.f32 %v1247, %v1141
  %1251 = vrot.lane.b32.xlu0 %v1248, 32
  %v1252 = vpop.permute.xlu0 %1251
  %v1254 = vmul.f32 %v1247, %v1252
  %1256 = vrot.lane.b32.xlu0 %v1254, 32
  %v1257 = vpop.permute.xlu0 %1256
  %v1259 = vadd.f32 %v1249, %v1257
  %v1260 = vtanh.pop %v1259
  %1262 = vrot.lane.b32.xlu0 %v1260, 32
  %v1263 = vpop.permute.xlu0 %1262
  %v1265 = vmul.f32 %v1247, %v1263
  %1267 = vrot.lane.b32.xlu0 %v1265, 64
  %v1268 = vpop.permute.xlu0 %1267
  %v1269 = vsel %vm691, %v1268, 0
  %1271 = vmatpush.msra.mxu0 0.0
  %1272 = vmatpush.msra.mxu0 0.0
  %1273 = vmatpush.msra.mxu0 0.0
  %1274 = vmatpush.msra.mxu0 0.0
  %1275 = vmatpush.msra.mxu0 0.0
  %1276 = vmatpush.msra.mxu0 0.0
  %1277 = vmatpush.msra.mxu0 0.0
  %1278 = vmatpush.msra.mxu0 0.0
  %1279 = vmatpush.msra.mxu0 0.0
  %1280 = vmatpush.msra.mxu0 0.0
  %1281 = vmatpush.msra.mxu0 0.0
  %1282 = vmatpush.msra.mxu0 0.0
  %1283 = vmatpush.msra.mxu0 %v680
  %1284 = vmatpush.msra.mxu0 %v679
  %1285 = vmatpush.msra.mxu0 %v678
  %1286 = vmatpush.msra.mxu0 %v677
  %1287 = vmatmul.f32.gmra.mxu0 %v1269
  %v1288 = vpop.f32.mrf.mxu0
  %v1289 = vadd.f32 %v785, %v1288
  %1290 = vdwg.mxu0
  %v1291 = vxor.u32 %v1289, 2147483648
  %v1292 = vmul.f32 %v1291, 1.442695
  %v1293 = vpow.pop %v1292
  %v1294 = vadd.f32 %v1293, 1.0
  %v1295 = vrcp.pop %v1294
  %v1296 = vmul.f32 %v1294, %v1295
  %v1297 = vsub.f32 1.0, %v1296
  %v1298 = vmul.f32 %v1295, %v1297
  %v1299 = vadd.f32 %v1295, %v1298
  %vm1300 = vweird.f32 %v1294
  %vm1301 = vweird.f32 %v1295
  %vm1302 = vmor %vm1300, %vm1301
  %v1303 = vsel %vm1302, %v1295, %v1299
  %v1304 = vand.u32 2147483647, %v1294
  %vm1305 = vcmp.eq.f32.partialorder %v1304, 8.507059e+37
  %v1306 = vand.u32 %v1294, 2147483648
  %v1307 = vor.u32 1.1754944e-38, %v1306
  %v1308 = vsel %vm1305, %v1307, %v1303
  %v1309 = vmul.f32 1.0, %v1308
  %v1310 = vsub.f32 1.0, %v1309
  %1312 = vrot.lane.b32.xlu0 %v1310, 1
  %v1313 = vpop.permute.xlu0 %1312
  %v1315 = vsel %vm64, %v1289, %v1309
  %v1316 = vsel %vm837, %v1315, %v1313
  %v1317 = vsel %vm839, %v1316, 0.0
  %s1318 = scalar_lea.vmem %s14, 32
  %1319 = vst [vmem:[%s1318] sm:$0xff] %v1317
  %1321 = vset.pattern.permute.xlu0 34
  %1322 = vperm.xlu0 %1321, %v1309
  %v1323 = vpop.permute.xlu0 %1322
  %v1325 = vmul.f32 %v1323, %v848
  %1326 = vmatpush.msra.mxu0 0.0
  %1327 = vmatpush.msra.mxu0 0.0
  %1328 = vmatpush.msra.mxu0 0.0
  %1329 = vmatpush.msra.mxu0 0.0
  %1330 = vmatpush.msra.mxu0 0.0
  %1331 = vmatpush.msra.mxu0 0.0
  %1332 = vmatpush.msra.mxu0 0.0
  %1333 = vmatpush.msra.mxu0 0.0
  %1334 = vmatpush.msra.mxu0 0.0
  %1335 = vmatpush.msra.mxu0 0.0
  %1336 = vmatpush.msra.mxu0 0.0
  %1337 = vmatpush.msra.mxu0 0.0
  %1338 = vmatpush.msra.mxu0 %v674
  %1339 = vmatpush.msra.mxu0 %v673
  %1340 = vmatpush.msra.mxu0 %v672
  %1341 = vmatpush.msra.mxu0 %v671
  %1342 = vmatmul.f32.gmra.mxu0 %v1269
  %v1343 = vpop.f32.mrf.mxu0
  %v1344 = vadd.f32 %v1325, %v1343
  %1345 = vdwg.mxu0
  %v1346 = vadd.f32 %v1344, %v872
  %v1347 = vxor.u32 %v1346, 2147483648
  %v1348 = vmul.f32 %v1347, 1.442695
  %v1349 = vpow.pop %v1348
  %v1350 = vadd.f32 %v1349, 1.0
  %v1351 = vrcp.pop %v1350
  %v1352 = vmul.f32 %v1350, %v1351
  %v1353 = vsub.f32 1.0, %v1352
  %v1354 = vmul.f32 %v1351, %v1353
  %v1355 = vadd.f32 %v1351, %v1354
  %vm1356 = vweird.f32 %v1350
  %vm1357 = vweird.f32 %v1351
  %vm1358 = vmor %vm1356, %vm1357
  %v1359 = vsel %vm1358, %v1351, %v1355
  %v1360 = vand.u32 2147483647, %v1350
  %vm1361 = vcmp.eq.f32.partialorder %v1360, 8.507059e+37
  %v1362 = vand.u32 %v1350, 2147483648
  %v1363 = vor.u32 1.1754944e-38, %v1362
  %v1364 = vsel %vm1361, %v1363, %v1359
  %v1365 = vmul.f32 1.0, %v1364
  %v1366 = vtanh.pop %v1346
  %v1367 = vmul.f32 %v1365, %v1259
  %1369 = vrot.lane.b32.xlu0 %v1366, 32
  %v1370 = vpop.permute.xlu0 %1369
  %v1372 = vmul.f32 %v1365, %v1370
  %1374 = vrot.lane.b32.xlu0 %v1372, 32
  %v1375 = vpop.permute.xlu0 %1374
  %v1377 = vadd.f32 %v1367, %v1375
  %v1378 = vtanh.pop %v1377
  %1380 = vrot.lane.b32.xlu0 %v1378, 32
  %v1381 = vpop.permute.xlu0 %1380
  %v1383 = vmul.f32 %v1365, %v1381
  %1385 = vrot.lane.b32.xlu0 %v1383, 64
  %v1386 = vpop.permute.xlu0 %1385
  %v1387 = vsel %vm691, %v1386, 0
  %1389 = vmatpush.msra.mxu0 0.0
  %1390 = vmatpush.msra.mxu0 0.0
  %1391 = vmatpush.msra.mxu0 0.0
  %1392 = vmatpush.msra.mxu0 0.0
  %1393 = vmatpush.msra.mxu0 0.0
  %1394 = vmatpush.msra.mxu0 0.0
  %1395 = vmatpush.msra.mxu0 0.0
  %1396 = vmatpush.msra.mxu0 0.0
  %1397 = vmatpush.msra.mxu0 0.0
  %1398 = vmatpush.msra.mxu0 0.0
  %1399 = vmatpush.msra.mxu0 0.0
  %1400 = vmatpush.msra.mxu0 0.0
  %1401 = vmatpush.msra.mxu0 %v680
  %1402 = vmatpush.msra.mxu0 %v679
  %1403 = vmatpush.msra.mxu0 %v678
  %1404 = vmatpush.msra.mxu0 %v677
  %1405 = vmatmul.f32.gmra.mxu0 %v1387
  %v1406 = vpop.f32.mrf.mxu0
  %v1407 = vadd.f32 %v785, %v1406
  %1408 = vdwg.mxu0
  %v1409 = vxor.u32 %v1407, 2147483648
  %v1410 = vmul.f32 %v1409, 1.442695
  %v1411 = vpow.pop %v1410
  %v1412 = vadd.f32 %v1411, 1.0
  %v1413 = vrcp.pop %v1412
  %v1414 = vmul.f32 %v1412, %v1413
  %v1415 = vsub.f32 1.0, %v1414
  %v1416 = vmul.f32 %v1413, %v1415
  %v1417 = vadd.f32 %v1413, %v1416
  %vm1418 = vweird.f32 %v1412
  %vm1419 = vweird.f32 %v1413
  %vm1420 = vmor %vm1418, %vm1419
  %v1421 = vsel %vm1420, %v1413, %v1417
  %v1422 = vand.u32 2147483647, %v1412
  %vm1423 = vcmp.eq.f32.partialorder %v1422, 8.507059e+37
  %v1424 = vand.u32 %v1412, 2147483648
  %v1425 = vor.u32 1.1754944e-38, %v1424
  %v1426 = vsel %vm1423, %v1425, %v1421
  %v1427 = vmul.f32 1.0, %v1426
  %v1428 = vsub.f32 1.0, %v1427
  %1430 = vrot.lane.b32.xlu0 %v1428, 1
  %v1431 = vpop.permute.xlu0 %1430
  %v1433 = vsel %vm64, %v1407, %v1427
  %v1434 = vsel %vm837, %v1433, %v1431
  %v1435 = vsel %vm839, %v1434, 0.0
  %s1436 = scalar_lea.vmem %s14, 40
  %1437 = vst [vmem:[%s1436] sm:$0xff] %v1435
  // Predicated region
  $region58: #{lstm_forward.1} parent=0 // pred_check
    _
  $region59: #{lstm_forward.1} parent=0 // pred_check_branch
    %1439 = sbr.rel (0) target = $region61
  $region60: #{lstm_forward.1} parent=0 // pred_region
    _
  $region61: #{lstm_forward.1} parent=0 // pred_fallthru
    _
  // Predicated region
  $region62: #{lstm_forward.1} parent=0 // pred_check
    _
  $region63: #{lstm_forward.1} parent=0 // pred_check_branch
    %1441 = sbr.rel (0) target = $region65
  $region64: #{lstm_forward.1} parent=0 // pred_region
    _
  $region65: #{lstm_forward.1} parent=0 // pred_fallthru
    _

</llo_original>
